<compile_context>
chip_gen: v6e
topology: v6e:2x2x1
jax: 0.10.0
libtpu: 0.0.40
codegen_flags: <defaults>
</compile_context>

<pallas_src>
import functools

import jax
import jax.numpy as jnp
from jax.experimental import pallas as pl
from jax.experimental.pallas import tpu as pltpu

# ---------------------------------------------------------------------------
# Tiling knobs
# ---------------------------------------------------------------------------
_CHUNK = 1024           # batch rows per inner VPU chunk = one (8,128) f32 vreg plane
TB_MAX = 65536          # max batch rows per grid step (multiple of _CHUNK)
TARGET_STEPS = 8        # aim for >= this many grid steps (v7x megacore sharding)
SMALL_BATCH_XLA = 2048  # below this, plain XLA beats the pallas_call fixed cost


def _round_up(n, m):
    return ((n + m - 1) // m) * m


def _cdiv(a, b):
    return (a + b - 1) // b


# ---------------------------------------------------------------------------
# Kernel: VPU per-channel MLP over (8,128) batch planes
# ---------------------------------------------------------------------------
def _mlp_kernel(x_ref, w1_ref, b1_ref, w2_ref, b2_ref, w3_ref, b3_ref, o_ref,
                *, dims, rows_per_chunk):
    # x_ref: (d0, TP, 128) VMEM, o_ref: (TP, 128) VMEM.
    # wN_ref / bN_ref: flattened f32 in SMEM, read as scalars.
    d0, d1, d2, d3 = dims                      # 5, 16, 8, 1
    tp = o_ref.shape[0]
    r = rows_per_chunk                         # 8 sublane rows per chunk
    n_chunks = tp // r

    def chunk(j, carry):
        r0 = pl.multiple_of(j * r, r)
        # 5 input planes, each exactly one f32 vreg -> whole working set fits in vregs.
        xs = [x_ref[c, pl.ds(r0, r), :].astype(jnp.float32) for c in range(d0)]

        # Layer 1: 5 -> 16, scalar-weight MACs on the VPU.
        h1 = []
        for o in range(d1):
            acc = b1_ref[o] + w1_ref[o * d0] * xs[0]
            for c in range(1, d0):
                acc = acc + w1_ref[o * d0 + c] * xs[c]
            h1.append(jnp.maximum(acc, 0.0))

        # Layer 2: 16 -> 8.
        h2 = []
        for o in range(d2):
            acc = b2_ref[o] + w2_ref[o * d1] * h1[0]
            for c in range(1, d1):
                acc = acc + w2_ref[o * d1 + c] * h1[c]
            h2.append(jnp.maximum(acc, 0.0))

        # Layer 3: 8 -> 1, then sigmoid (EUP slot, overlaps the VALU work).
        z = b3_ref[0] + w3_ref[0] * h2[0]
        for c in range(1, d2):
            z = z + w3_ref[c] * h2[c]
        o_ref[pl.ds(r0, r), :] = jax.nn.sigmoid(z).astype(o_ref.dtype)
        return carry

    jax.lax.fori_loop(0, n_chunks, chunk, 0)


# ---------------------------------------------------------------------------
# Wrappers
# ---------------------------------------------------------------------------
@functools.partial(jax.jit, static_argnames=("tb_max", "target_steps"))
def data_validation_nn_t(xT, w1, b1, w2, b2, w3, b3,
                         tb_max=TB_MAX, target_steps=TARGET_STEPS):
    """Forward pass taking x already transposed: xT is (in_features, batch).

    Preferred entry point for large batches: it avoids the extra HBM read+write pass
    that a wrapper-side transpose of a (batch, 5) array would cost.
    Returns (batch, 1) float32.
    """
    feat, batch = xT.shape
    d1, d2, d3 = w1.shape[0], w2.shape[0], w3.shape[0]
    assert d3 == 1, "final layer must have a single output"

    # Pad batch only up to one plane-chunk (zeros -> sigmoid never sees junk in valid cols).
    padded = _round_up(batch, _CHUNK)
    if padded != batch:
        xT = jnp.pad(xT, ((0, 0), (0, padded - batch)))
    p_rows = padded // 128                                    # multiple of 8
    x3 = xT.reshape(feat, p_rows, 128)                        # contiguous -> free reshape

    # Grid tile: multiple of the 8-row chunk, capped by TB_MAX, sized for >= target_steps
    # steps (v7x megacore). Ragged last block is handled by Pallas (OOB writes dropped).
    rpc = _CHUNK // 128
    tp_cap = max(rpc, (tb_max // 128) // rpc * rpc)
    tp = min(tp_cap, _round_up(_cdiv(p_rows, target_steps), rpc))
    grid = (_cdiv(p_rows, tp),)

    flat = lambda a: a.reshape(-1).astype(jnp.float32)
    smem = pl.BlockSpec(memory_space=pltpu.MemorySpace.SMEM)  # tiny weight/bias tables

    out = pl.pallas_call(
        functools.partial(_mlp_kernel, dims=(feat, d1, d2, d3), rows_per_chunk=rpc),
        out_shape=jax.ShapeDtypeStruct((p_rows, 128), jnp.float32),
        grid=grid,
        in_specs=[
            pl.BlockSpec((feat, tp, 128), lambda i: (0, i, 0)),   # x streams with the grid
            smem, smem, smem, smem, smem, smem,
        ],
        out_specs=pl.BlockSpec((tp, 128), lambda i: (i, 0)),      # lane-dense store
        compiler_params=pltpu.CompilerParams(
            dimension_semantics=("parallel",),                    # shard batch across TCs (v7x)
        ),
    )(x3, flat(w1), flat(b1), flat(w2), flat(b2), flat(w3), flat(b3))

    return out.reshape(padded, 1)[:batch]


def _xla_forward(x, w1, b1, w2, b2, w3, b3):
    dot = functools.partial(jnp.dot, precision=jax.lax.Precision.HIGHEST)
    h1 = jnp.maximum(dot(x, w1.T) + b1, 0.0)
    h2 = jnp.maximum(dot(h1, w2.T) + b2, 0.0)
    return jax.nn.sigmoid(dot(h2, w3.T) + b3)


@functools.partial(jax.jit,
                   static_argnames=("tb_max", "target_steps", "small_batch_xla"))
def data_validation_nn(x, w1, b1, w2, b2, w3, b3,
                       tb_max=TB_MAX, target_steps=TARGET_STEPS, small_batch_xla=True):
    """x: (batch, in_features); wN PyTorch-style (out, in); bN (out,). Returns (batch, 1)."""
    batch = x.shape[0]
    if small_batch_xla and batch <= SMALL_BATCH_XLA:
        return _xla_forward(x, w1, b1, w2, b2, w3, b3)
    # NOTE: x.T is an extra HBM pass over the only large operand; producers that can emit
    # x as (features, batch) should call data_validation_nn_t directly to skip it.
    return data_validation_nn_t(x.T, w1, b1, w2, b2, w3, b3,
                                tb_max=tb_max, target_steps=target_steps)


# ---------------------------------------------------------------------------
# Params / reference / tests
# ---------------------------------------------------------------------------
def init_params(key, input_size=5):
    """PyTorch nn.Linear default init: U[-1/sqrt(fan_in), 1/sqrt(fan_in)], (out, in) weights."""
    dims = [(input_size, 16), (16, 8), (8, 1)]
    params = []
    for fan_in, fan_out in dims:
        key, kw, kb = jax.random.split(key, 3)
        bound = 1.0 / jnp.sqrt(jnp.float32(fan_in))
        w = jax.random.uniform(kw, (fan_out, fan_in), jnp.float32, -bound, bound)
        b = jax.random.uniform(kb, (fan_out,), jnp.float32, -bound, bound)
        params.extend([w, b])
    return params


if __name__ == "__main__":
    input_size = 5
    key = jax.random.PRNGKey(0)
    key, kx1, kx2, kx3 = jax.random.split(key, 4)
    params = init_params(key, input_size)

    def check(batch, kx, **kw):
        x = jax.random.normal(kx, (batch, input_size), jnp.float32)
        out = jax.block_until_ready(data_validation_nn(x, *params, **kw))
        ref = _xla_forward(x, *params)
        assert out.shape == (batch, 1), out.shape
        assert jnp.allclose(out, ref, atol=1e-5, rtol=1e-5), f"mismatch at batch={batch}"

    # Pallas path forced: single tile, batch padded to one 1024-row plane-chunk.
    check(8, kx1, small_batch_xla=False)
    # Pallas path: several inner VPU chunks inside one grid step, zero-padding tail.
    check(300, kx2, small_batch_xla=False)
    # Pallas path: multiple grid steps with a ragged last block (P=24, tp=16 -> grid=2).
    check(2500, kx3, small_batch_xla=False, target_steps=2)
    # Default dispatch: small batches take the plain-XLA fast path.
    check(300, kx2)

    print("KERNEL_OK")
</pallas_src>

<mosaic_0001>
module attributes {stable_mosaic.version = 11 : i64} {
  func.func @_mlp_kernel(%arg0: i32, %arg1: memref<5x8x128xf32, #tpu.memory_space<vmem>>, %arg2: memref<80xf32, #tpu.memory_space<smem>>, %arg3: memref<16xf32, #tpu.memory_space<smem>>, %arg4: memref<128xf32, #tpu.memory_space<smem>>, %arg5: memref<8xf32, #tpu.memory_space<smem>>, %arg6: memref<8xf32, #tpu.memory_space<smem>>, %arg7: memref<1xf32, #tpu.memory_space<smem>>, %arg8: memref<8x128xf32, #tpu.memory_space<vmem>>) attributes {dimension_semantics = [#tpu.dimension_semantics<parallel>], iteration_bounds = array<i64: 1>, scalar_prefetch = 0 : i64, scratch_operands = 0 : i64, tpu.core_type = #tpu.core_type<tc>, window_params = [{transform_indices = @transform_0, window_bounds = array<i64: 5, 8, 128>}, {transform_indices = @transform_1, window_bounds = array<i64: 80>}, {transform_indices = @transform_2, window_bounds = array<i64: 16>}, {transform_indices = @transform_3, window_bounds = array<i64: 128>}, {transform_indices = @transform_4, window_bounds = array<i64: 8>}, {transform_indices = @transform_5, window_bounds = array<i64: 8>}, {transform_indices = @transform_6, window_bounds = array<i64: 1>}, {transform_indices = @transform_7, window_bounds = array<i64: 8, 128>}]} {
    %c0_i32 = arith.constant 0 : i32
    %c8_i32 = arith.constant 8 : i32
    %0 = arith.muli %c0_i32, %c8_i32 : i32
    %1 = tpu.assume_multiple %0, 8 : i32
    %c0 = arith.constant 0 : index
    %2 = arith.index_cast %1 : i32 to index
    %c0_0 = arith.constant 0 : index
    %3 = vector.load %arg1[%c0, %2, %c0_0] : memref<5x8x128xf32, #tpu.memory_space<vmem>>, vector<1x8x128xf32>
    %4 = vector.shape_cast %3 : vector<1x8x128xf32> to vector<8x128xf32>
    %c1 = arith.constant 1 : index
    %5 = arith.index_cast %1 : i32 to index
    %c0_1 = arith.constant 0 : index
    %6 = vector.load %arg1[%c1, %5, %c0_1] : memref<5x8x128xf32, #tpu.memory_space<vmem>>, vector<1x8x128xf32>
    %7 = vector.shape_cast %6 : vector<1x8x128xf32> to vector<8x128xf32>
    %c2 = arith.constant 2 : index
    %8 = arith.index_cast %1 : i32 to index
    %c0_2 = arith.constant 0 : index
    %9 = vector.load %arg1[%c2, %8, %c0_2] : memref<5x8x128xf32, #tpu.memory_space<vmem>>, vector<1x8x128xf32>
    %10 = vector.shape_cast %9 : vector<1x8x128xf32> to vector<8x128xf32>
    %c3 = arith.constant 3 : index
    %11 = arith.index_cast %1 : i32 to index
    %c0_3 = arith.constant 0 : index
    %12 = vector.load %arg1[%c3, %11, %c0_3] : memref<5x8x128xf32, #tpu.memory_space<vmem>>, vector<1x8x128xf32>
    %13 = vector.shape_cast %12 : vector<1x8x128xf32> to vector<8x128xf32>
    %c4 = arith.constant 4 : index
    %14 = arith.index_cast %1 : i32 to index
    %c0_4 = arith.constant 0 : index
    %15 = vector.load %arg1[%c4, %14, %c0_4] : memref<5x8x128xf32, #tpu.memory_space<vmem>>, vector<1x8x128xf32>
    %16 = vector.shape_cast %15 : vector<1x8x128xf32> to vector<8x128xf32>
    %c0_5 = arith.constant 0 : index
    %17 = memref.load %arg3[%c0_5] : memref<16xf32, #tpu.memory_space<smem>>
    %c0_6 = arith.constant 0 : index
    %18 = memref.load %arg2[%c0_6] : memref<80xf32, #tpu.memory_space<smem>>
    %19 = vector.broadcast %18 : f32 to vector<8x128xf32>
    %20 = arith.mulf %19, %4 : vector<8x128xf32>
    %21 = vector.broadcast %17 : f32 to vector<8x128xf32>
    %22 = arith.addf %21, %20 : vector<8x128xf32>
    %c1_7 = arith.constant 1 : index
    %23 = memref.load %arg2[%c1_7] : memref<80xf32, #tpu.memory_space<smem>>
    %24 = vector.broadcast %23 : f32 to vector<8x128xf32>
    %25 = arith.mulf %24, %7 : vector<8x128xf32>
    %26 = arith.addf %22, %25 : vector<8x128xf32>
    %c2_8 = arith.constant 2 : index
    %27 = memref.load %arg2[%c2_8] : memref<80xf32, #tpu.memory_space<smem>>
    %28 = vector.broadcast %27 : f32 to vector<8x128xf32>
    %29 = arith.mulf %28, %10 : vector<8x128xf32>
    %30 = arith.addf %26, %29 : vector<8x128xf32>
    %c3_9 = arith.constant 3 : index
    %31 = memref.load %arg2[%c3_9] : memref<80xf32, #tpu.memory_space<smem>>
    %32 = vector.broadcast %31 : f32 to vector<8x128xf32>
    %33 = arith.mulf %32, %13 : vector<8x128xf32>
    %34 = arith.addf %30, %33 : vector<8x128xf32>
    %c4_10 = arith.constant 4 : index
    %35 = memref.load %arg2[%c4_10] : memref<80xf32, #tpu.memory_space<smem>>
    %36 = vector.broadcast %35 : f32 to vector<8x128xf32>
    %37 = arith.mulf %36, %16 : vector<8x128xf32>
    %38 = arith.addf %34, %37 : vector<8x128xf32>
    %cst = arith.constant 0.000000e+00 : f32
    %39 = vector.broadcast %cst : f32 to vector<8x128xf32>
    %40 = arith.maximumf %38, %39 : vector<8x128xf32>
    %c1_11 = arith.constant 1 : index
    %41 = memref.load %arg3[%c1_11] : memref<16xf32, #tpu.memory_space<smem>>
    %c5 = arith.constant 5 : index
    %42 = memref.load %arg2[%c5] : memref<80xf32, #tpu.memory_space<smem>>
    %43 = vector.broadcast %42 : f32 to vector<8x128xf32>
    %44 = arith.mulf %43, %4 : vector<8x128xf32>
    %45 = vector.broadcast %41 : f32 to vector<8x128xf32>
    %46 = arith.addf %45, %44 : vector<8x128xf32>
    %c6 = arith.constant 6 : index
    %47 = memref.load %arg2[%c6] : memref<80xf32, #tpu.memory_space<smem>>
    %48 = vector.broadcast %47 : f32 to vector<8x128xf32>
    %49 = arith.mulf %48, %7 : vector<8x128xf32>
    %50 = arith.addf %46, %49 : vector<8x128xf32>
    %c7 = arith.constant 7 : index
    %51 = memref.load %arg2[%c7] : memref<80xf32, #tpu.memory_space<smem>>
    %52 = vector.broadcast %51 : f32 to vector<8x128xf32>
    %53 = arith.mulf %52, %10 : vector<8x128xf32>
    %54 = arith.addf %50, %53 : vector<8x128xf32>
    %c8 = arith.constant 8 : index
    %55 = memref.load %arg2[%c8] : memref<80xf32, #tpu.memory_space<smem>>
    %56 = vector.broadcast %55 : f32 to vector<8x128xf32>
    %57 = arith.mulf %56, %13 : vector<8x128xf32>
    %58 = arith.addf %54, %57 : vector<8x128xf32>
    %c9 = arith.constant 9 : index
    %59 = memref.load %arg2[%c9] : memref<80xf32, #tpu.memory_space<smem>>
    %60 = vector.broadcast %59 : f32 to vector<8x128xf32>
    %61 = arith.mulf %60, %16 : vector<8x128xf32>
    %62 = arith.addf %58, %61 : vector<8x128xf32>
    %cst_12 = arith.constant 0.000000e+00 : f32
    %63 = vector.broadcast %cst_12 : f32 to vector<8x128xf32>
    %64 = arith.maximumf %62, %63 : vector<8x128xf32>
    %c2_13 = arith.constant 2 : index
    %65 = memref.load %arg3[%c2_13] : memref<16xf32, #tpu.memory_space<smem>>
    %c10 = arith.constant 10 : index
    %66 = memref.load %arg2[%c10] : memref<80xf32, #tpu.memory_space<smem>>
    %67 = vector.broadcast %66 : f32 to vector<8x128xf32>
    %68 = arith.mulf %67, %4 : vector<8x128xf32>
    %69 = vector.broadcast %65 : f32 to vector<8x128xf32>
    %70 = arith.addf %69, %68 : vector<8x128xf32>
    %c11 = arith.constant 11 : index
    %71 = memref.load %arg2[%c11] : memref<80xf32, #tpu.memory_space<smem>>
    %72 = vector.broadcast %71 : f32 to vector<8x128xf32>
    %73 = arith.mulf %72, %7 : vector<8x128xf32>
    %74 = arith.addf %70, %73 : vector<8x128xf32>
    %c12 = arith.constant 12 : index
    %75 = memref.load %arg2[%c12] : memref<80xf32, #tpu.memory_space<smem>>
    %76 = vector.broadcast %75 : f32 to vector<8x128xf32>
    %77 = arith.mulf %76, %10 : vector<8x128xf32>
    %78 = arith.addf %74, %77 : vector<8x128xf32>
    %c13 = arith.constant 13 : index
    %79 = memref.load %arg2[%c13] : memref<80xf32, #tpu.memory_space<smem>>
    %80 = vector.broadcast %79 : f32 to vector<8x128xf32>
    %81 = arith.mulf %80, %13 : vector<8x128xf32>
    %82 = arith.addf %78, %81 : vector<8x128xf32>
    %c14 = arith.constant 14 : index
    %83 = memref.load %arg2[%c14] : memref<80xf32, #tpu.memory_space<smem>>
    %84 = vector.broadcast %83 : f32 to vector<8x128xf32>
    %85 = arith.mulf %84, %16 : vector<8x128xf32>
    %86 = arith.addf %82, %85 : vector<8x128xf32>
    %cst_14 = arith.constant 0.000000e+00 : f32
    %87 = vector.broadcast %cst_14 : f32 to vector<8x128xf32>
    %88 = arith.maximumf %86, %87 : vector<8x128xf32>
    %c3_15 = arith.constant 3 : index
    %89 = memref.load %arg3[%c3_15] : memref<16xf32, #tpu.memory_space<smem>>
    %c15 = arith.constant 15 : index
    %90 = memref.load %arg2[%c15] : memref<80xf32, #tpu.memory_space<smem>>
    %91 = vector.broadcast %90 : f32 to vector<8x128xf32>
    %92 = arith.mulf %91, %4 : vector<8x128xf32>
    %93 = vector.broadcast %89 : f32 to vector<8x128xf32>
    %94 = arith.addf %93, %92 : vector<8x128xf32>
    %c16 = arith.constant 16 : index
    %95 = memref.load %arg2[%c16] : memref<80xf32, #tpu.memory_space<smem>>
    %96 = vector.broadcast %95 : f32 to vector<8x128xf32>
    %97 = arith.mulf %96, %7 : vector<8x128xf32>
    %98 = arith.addf %94, %97 : vector<8x128xf32>
    %c17 = arith.constant 17 : index
    %99 = memref.load %arg2[%c17] : memref<80xf32, #tpu.memory_space<smem>>
    %100 = vector.broadcast %99 : f32 to vector<8x128xf32>
    %101 = arith.mulf %100, %10 : vector<8x128xf32>
    %102 = arith.addf %98, %101 : vector<8x128xf32>
    %c18 = arith.constant 18 : index
    %103 = memref.load %arg2[%c18] : memref<80xf32, #tpu.memory_space<smem>>
    %104 = vector.broadcast %103 : f32 to vector<8x128xf32>
    %105 = arith.mulf %104, %13 : vector<8x128xf32>
    %106 = arith.addf %102, %105 : vector<8x128xf32>
    %c19 = arith.constant 19 : index
    %107 = memref.load %arg2[%c19] : memref<80xf32, #tpu.memory_space<smem>>
    %108 = vector.broadcast %107 : f32 to vector<8x128xf32>
    %109 = arith.mulf %108, %16 : vector<8x128xf32>
    %110 = arith.addf %106, %109 : vector<8x128xf32>
    %cst_16 = arith.constant 0.000000e+00 : f32
    %111 = vector.broadcast %cst_16 : f32 to vector<8x128xf32>
    %112 = arith.maximumf %110, %111 : vector<8x128xf32>
    %c4_17 = arith.constant 4 : index
    %113 = memref.load %arg3[%c4_17] : memref<16xf32, #tpu.memory_space<smem>>
    %c20 = arith.constant 20 : index
    %114 = memref.load %arg2[%c20] : memref<80xf32, #tpu.memory_space<smem>>
    %115 = vector.broadcast %114 : f32 to vector<8x128xf32>
    %116 = arith.mulf %115, %4 : vector<8x128xf32>
    %117 = vector.broadcast %113 : f32 to vector<8x128xf32>
    %118 = arith.addf %117, %116 : vector<8x128xf32>
    %c21 = arith.constant 21 : index
    %119 = memref.load %arg2[%c21] : memref<80xf32, #tpu.memory_space<smem>>
    %120 = vector.broadcast %119 : f32 to vector<8x128xf32>
    %121 = arith.mulf %120, %7 : vector<8x128xf32>
    %122 = arith.addf %118, %121 : vector<8x128xf32>
    %c22 = arith.constant 22 : index
    %123 = memref.load %arg2[%c22] : memref<80xf32, #tpu.memory_space<smem>>
    %124 = vector.broadcast %123 : f32 to vector<8x128xf32>
    %125 = arith.mulf %124, %10 : vector<8x128xf32>
    %126 = arith.addf %122, %125 : vector<8x128xf32>
    %c23 = arith.constant 23 : index
    %127 = memref.load %arg2[%c23] : memref<80xf32, #tpu.memory_space<smem>>
    %128 = vector.broadcast %127 : f32 to vector<8x128xf32>
    %129 = arith.mulf %128, %13 : vector<8x128xf32>
    %130 = arith.addf %126, %129 : vector<8x128xf32>
    %c24 = arith.constant 24 : index
    %131 = memref.load %arg2[%c24] : memref<80xf32, #tpu.memory_space<smem>>
    %132 = vector.broadcast %131 : f32 to vector<8x128xf32>
    %133 = arith.mulf %132, %16 : vector<8x128xf32>
    %134 = arith.addf %130, %133 : vector<8x128xf32>
    %cst_18 = arith.constant 0.000000e+00 : f32
    %135 = vector.broadcast %cst_18 : f32 to vector<8x128xf32>
    %136 = arith.maximumf %134, %135 : vector<8x128xf32>
    %c5_19 = arith.constant 5 : index
    %137 = memref.load %arg3[%c5_19] : memref<16xf32, #tpu.memory_space<smem>>
    %c25 = arith.constant 25 : index
    %138 = memref.load %arg2[%c25] : memref<80xf32, #tpu.memory_space<smem>>
    %139 = vector.broadcast %138 : f32 to vector<8x128xf32>
    %140 = arith.mulf %139, %4 : vector<8x128xf32>
    %141 = vector.broadcast %137 : f32 to vector<8x128xf32>
    %142 = arith.addf %141, %140 : vector<8x128xf32>
    %c26 = arith.constant 26 : index
    %143 = memref.load %arg2[%c26] : memref<80xf32, #tpu.memory_space<smem>>
    %144 = vector.broadcast %143 : f32 to vector<8x128xf32>
    %145 = arith.mulf %144, %7 : vector<8x128xf32>
    %146 = arith.addf %142, %145 : vector<8x128xf32>
    %c27 = arith.constant 27 : index
    %147 = memref.load %arg2[%c27] : memref<80xf32, #tpu.memory_space<smem>>
    %148 = vector.broadcast %147 : f32 to vector<8x128xf32>
    %149 = arith.mulf %148, %10 : vector<8x128xf32>
    %150 = arith.addf %146, %149 : vector<8x128xf32>
    %c28 = arith.constant 28 : index
    %151 = memref.load %arg2[%c28] : memref<80xf32, #tpu.memory_space<smem>>
    %152 = vector.broadcast %151 : f32 to vector<8x128xf32>
    %153 = arith.mulf %152, %13 : vector<8x128xf32>
    %154 = arith.addf %150, %153 : vector<8x128xf32>
    %c29 = arith.constant 29 : index
    %155 = memref.load %arg2[%c29] : memref<80xf32, #tpu.memory_space<smem>>
    %156 = vector.broadcast %155 : f32 to vector<8x128xf32>
    %157 = arith.mulf %156, %16 : vector<8x128xf32>
    %158 = arith.addf %154, %157 : vector<8x128xf32>
    %cst_20 = arith.constant 0.000000e+00 : f32
    %159 = vector.broadcast %cst_20 : f32 to vector<8x128xf32>
    %160 = arith.maximumf %158, %159 : vector<8x128xf32>
    %c6_21 = arith.constant 6 : index
    %161 = memref.load %arg3[%c6_21] : memref<16xf32, #tpu.memory_space<smem>>
    %c30 = arith.constant 30 : index
    %162 = memref.load %arg2[%c30] : memref<80xf32, #tpu.memory_space<smem>>
    %163 = vector.broadcast %162 : f32 to vector<8x128xf32>
    %164 = arith.mulf %163, %4 : vector<8x128xf32>
    %165 = vector.broadcast %161 : f32 to vector<8x128xf32>
    %166 = arith.addf %165, %164 : vector<8x128xf32>
    %c31 = arith.constant 31 : index
    %167 = memref.load %arg2[%c31] : memref<80xf32, #tpu.memory_space<smem>>
    %168 = vector.broadcast %167 : f32 to vector<8x128xf32>
    %169 = arith.mulf %168, %7 : vector<8x128xf32>
    %170 = arith.addf %166, %169 : vector<8x128xf32>
    %c32 = arith.constant 32 : index
    %171 = memref.load %arg2[%c32] : memref<80xf32, #tpu.memory_space<smem>>
    %172 = vector.broadcast %171 : f32 to vector<8x128xf32>
    %173 = arith.mulf %172, %10 : vector<8x128xf32>
    %174 = arith.addf %170, %173 : vector<8x128xf32>
    %c33 = arith.constant 33 : index
    %175 = memref.load %arg2[%c33] : memref<80xf32, #tpu.memory_space<smem>>
    %176 = vector.broadcast %175 : f32 to vector<8x128xf32>
    %177 = arith.mulf %176, %13 : vector<8x128xf32>
    %178 = arith.addf %174, %177 : vector<8x128xf32>
    %c34 = arith.constant 34 : index
    %179 = memref.load %arg2[%c34] : memref<80xf32, #tpu.memory_space<smem>>
    %180 = vector.broadcast %179 : f32 to vector<8x128xf32>
    %181 = arith.mulf %180, %16 : vector<8x128xf32>
    %182 = arith.addf %178, %181 : vector<8x128xf32>
    %cst_22 = arith.constant 0.000000e+00 : f32
    %183 = vector.broadcast %cst_22 : f32 to vector<8x128xf32>
    %184 = arith.maximumf %182, %183 : vector<8x128xf32>
    %c7_23 = arith.constant 7 : index
    %185 = memref.load %arg3[%c7_23] : memref<16xf32, #tpu.memory_space<smem>>
    %c35 = arith.constant 35 : index
    %186 = memref.load %arg2[%c35] : memref<80xf32, #tpu.memory_space<smem>>
    %187 = vector.broadcast %186 : f32 to vector<8x128xf32>
    %188 = arith.mulf %187, %4 : vector<8x128xf32>
    %189 = vector.broadcast %185 : f32 to vector<8x128xf32>
    %190 = arith.addf %189, %188 : vector<8x128xf32>
    %c36 = arith.constant 36 : index
    %191 = memref.load %arg2[%c36] : memref<80xf32, #tpu.memory_space<smem>>
    %192 = vector.broadcast %191 : f32 to vector<8x128xf32>
    %193 = arith.mulf %192, %7 : vector<8x128xf32>
    %194 = arith.addf %190, %193 : vector<8x128xf32>
    %c37 = arith.constant 37 : index
    %195 = memref.load %arg2[%c37] : memref<80xf32, #tpu.memory_space<smem>>
    %196 = vector.broadcast %195 : f32 to vector<8x128xf32>
    %197 = arith.mulf %196, %10 : vector<8x128xf32>
    %198 = arith.addf %194, %197 : vector<8x128xf32>
    %c38 = arith.constant 38 : index
    %199 = memref.load %arg2[%c38] : memref<80xf32, #tpu.memory_space<smem>>
    %200 = vector.broadcast %199 : f32 to vector<8x128xf32>
    %201 = arith.mulf %200, %13 : vector<8x128xf32>
    %202 = arith.addf %198, %201 : vector<8x128xf32>
    %c39 = arith.constant 39 : index
    %203 = memref.load %arg2[%c39] : memref<80xf32, #tpu.memory_space<smem>>
    %204 = vector.broadcast %203 : f32 to vector<8x128xf32>
    %205 = arith.mulf %204, %16 : vector<8x128xf32>
    %206 = arith.addf %202, %205 : vector<8x128xf32>
    %cst_24 = arith.constant 0.000000e+00 : f32
    %207 = vector.broadcast %cst_24 : f32 to vector<8x128xf32>
    %208 = arith.maximumf %206, %207 : vector<8x128xf32>
    %c8_25 = arith.constant 8 : index
    %209 = memref.load %arg3[%c8_25] : memref<16xf32, #tpu.memory_space<smem>>
    %c40 = arith.constant 40 : index
    %210 = memref.load %arg2[%c40] : memref<80xf32, #tpu.memory_space<smem>>
    %211 = vector.broadcast %210 : f32 to vector<8x128xf32>
    %212 = arith.mulf %211, %4 : vector<8x128xf32>
    %213 = vector.broadcast %209 : f32 to vector<8x128xf32>
    %214 = arith.addf %213, %212 : vector<8x128xf32>
    %c41 = arith.constant 41 : index
    %215 = memref.load %arg2[%c41] : memref<80xf32, #tpu.memory_space<smem>>
    %216 = vector.broadcast %215 : f32 to vector<8x128xf32>
    %217 = arith.mulf %216, %7 : vector<8x128xf32>
    %218 = arith.addf %214, %217 : vector<8x128xf32>
    %c42 = arith.constant 42 : index
    %219 = memref.load %arg2[%c42] : memref<80xf32, #tpu.memory_space<smem>>
    %220 = vector.broadcast %219 : f32 to vector<8x128xf32>
    %221 = arith.mulf %220, %10 : vector<8x128xf32>
    %222 = arith.addf %218, %221 : vector<8x128xf32>
    %c43 = arith.constant 43 : index
    %223 = memref.load %arg2[%c43] : memref<80xf32, #tpu.memory_space<smem>>
    %224 = vector.broadcast %223 : f32 to vector<8x128xf32>
    %225 = arith.mulf %224, %13 : vector<8x128xf32>
    %226 = arith.addf %222, %225 : vector<8x128xf32>
    %c44 = arith.constant 44 : index
    %227 = memref.load %arg2[%c44] : memref<80xf32, #tpu.memory_space<smem>>
    %228 = vector.broadcast %227 : f32 to vector<8x128xf32>
    %229 = arith.mulf %228, %16 : vector<8x128xf32>
    %230 = arith.addf %226, %229 : vector<8x128xf32>
    %cst_26 = arith.constant 0.000000e+00 : f32
    %231 = vector.broadcast %cst_26 : f32 to vector<8x128xf32>
    %232 = arith.maximumf %230, %231 : vector<8x128xf32>
    %c9_27 = arith.constant 9 : index
    %233 = memref.load %arg3[%c9_27] : memref<16xf32, #tpu.memory_space<smem>>
    %c45 = arith.constant 45 : index
    %234 = memref.load %arg2[%c45] : memref<80xf32, #tpu.memory_space<smem>>
    %235 = vector.broadcast %234 : f32 to vector<8x128xf32>
    %236 = arith.mulf %235, %4 : vector<8x128xf32>
    %237 = vector.broadcast %233 : f32 to vector<8x128xf32>
    %238 = arith.addf %237, %236 : vector<8x128xf32>
    %c46 = arith.constant 46 : index
    %239 = memref.load %arg2[%c46] : memref<80xf32, #tpu.memory_space<smem>>
    %240 = vector.broadcast %239 : f32 to vector<8x128xf32>
    %241 = arith.mulf %240, %7 : vector<8x128xf32>
    %242 = arith.addf %238, %241 : vector<8x128xf32>
    %c47 = arith.constant 47 : index
    %243 = memref.load %arg2[%c47] : memref<80xf32, #tpu.memory_space<smem>>
    %244 = vector.broadcast %243 : f32 to vector<8x128xf32>
    %245 = arith.mulf %244, %10 : vector<8x128xf32>
    %246 = arith.addf %242, %245 : vector<8x128xf32>
    %c48 = arith.constant 48 : index
    %247 = memref.load %arg2[%c48] : memref<80xf32, #tpu.memory_space<smem>>
    %248 = vector.broadcast %247 : f32 to vector<8x128xf32>
    %249 = arith.mulf %248, %13 : vector<8x128xf32>
    %250 = arith.addf %246, %249 : vector<8x128xf32>
    %c49 = arith.constant 49 : index
    %251 = memref.load %arg2[%c49] : memref<80xf32, #tpu.memory_space<smem>>
    %252 = vector.broadcast %251 : f32 to vector<8x128xf32>
    %253 = arith.mulf %252, %16 : vector<8x128xf32>
    %254 = arith.addf %250, %253 : vector<8x128xf32>
    %cst_28 = arith.constant 0.000000e+00 : f32
    %255 = vector.broadcast %cst_28 : f32 to vector<8x128xf32>
    %256 = arith.maximumf %254, %255 : vector<8x128xf32>
    %c10_29 = arith.constant 10 : index
    %257 = memref.load %arg3[%c10_29] : memref<16xf32, #tpu.memory_space<smem>>
    %c50 = arith.constant 50 : index
    %258 = memref.load %arg2[%c50] : memref<80xf32, #tpu.memory_space<smem>>
    %259 = vector.broadcast %258 : f32 to vector<8x128xf32>
    %260 = arith.mulf %259, %4 : vector<8x128xf32>
    %261 = vector.broadcast %257 : f32 to vector<8x128xf32>
    %262 = arith.addf %261, %260 : vector<8x128xf32>
    %c51 = arith.constant 51 : index
    %263 = memref.load %arg2[%c51] : memref<80xf32, #tpu.memory_space<smem>>
    %264 = vector.broadcast %263 : f32 to vector<8x128xf32>
    %265 = arith.mulf %264, %7 : vector<8x128xf32>
    %266 = arith.addf %262, %265 : vector<8x128xf32>
    %c52 = arith.constant 52 : index
    %267 = memref.load %arg2[%c52] : memref<80xf32, #tpu.memory_space<smem>>
    %268 = vector.broadcast %267 : f32 to vector<8x128xf32>
    %269 = arith.mulf %268, %10 : vector<8x128xf32>
    %270 = arith.addf %266, %269 : vector<8x128xf32>
    %c53 = arith.constant 53 : index
    %271 = memref.load %arg2[%c53] : memref<80xf32, #tpu.memory_space<smem>>
    %272 = vector.broadcast %271 : f32 to vector<8x128xf32>
    %273 = arith.mulf %272, %13 : vector<8x128xf32>
    %274 = arith.addf %270, %273 : vector<8x128xf32>
    %c54 = arith.constant 54 : index
    %275 = memref.load %arg2[%c54] : memref<80xf32, #tpu.memory_space<smem>>
    %276 = vector.broadcast %275 : f32 to vector<8x128xf32>
    %277 = arith.mulf %276, %16 : vector<8x128xf32>
    %278 = arith.addf %274, %277 : vector<8x128xf32>
    %cst_30 = arith.constant 0.000000e+00 : f32
    %279 = vector.broadcast %cst_30 : f32 to vector<8x128xf32>
    %280 = arith.maximumf %278, %279 : vector<8x128xf32>
    %c11_31 = arith.constant 11 : index
    %281 = memref.load %arg3[%c11_31] : memref<16xf32, #tpu.memory_space<smem>>
    %c55 = arith.constant 55 : index
    %282 = memref.load %arg2[%c55] : memref<80xf32, #tpu.memory_space<smem>>
    %283 = vector.broadcast %282 : f32 to vector<8x128xf32>
    %284 = arith.mulf %283, %4 : vector<8x128xf32>
    %285 = vector.broadcast %281 : f32 to vector<8x128xf32>
    %286 = arith.addf %285, %284 : vector<8x128xf32>
    %c56 = arith.constant 56 : index
    %287 = memref.load %arg2[%c56] : memref<80xf32, #tpu.memory_space<smem>>
    %288 = vector.broadcast %287 : f32 to vector<8x128xf32>
    %289 = arith.mulf %288, %7 : vector<8x128xf32>
    %290 = arith.addf %286, %289 : vector<8x128xf32>
    %c57 = arith.constant 57 : index
    %291 = memref.load %arg2[%c57] : memref<80xf32, #tpu.memory_space<smem>>
    %292 = vector.broadcast %291 : f32 to vector<8x128xf32>
    %293 = arith.mulf %292, %10 : vector<8x128xf32>
    %294 = arith.addf %290, %293 : vector<8x128xf32>
    %c58 = arith.constant 58 : index
    %295 = memref.load %arg2[%c58] : memref<80xf32, #tpu.memory_space<smem>>
    %296 = vector.broadcast %295 : f32 to vector<8x128xf32>
    %297 = arith.mulf %296, %13 : vector<8x128xf32>
    %298 = arith.addf %294, %297 : vector<8x128xf32>
    %c59 = arith.constant 59 : index
    %299 = memref.load %arg2[%c59] : memref<80xf32, #tpu.memory_space<smem>>
    %300 = vector.broadcast %299 : f32 to vector<8x128xf32>
    %301 = arith.mulf %300, %16 : vector<8x128xf32>
    %302 = arith.addf %298, %301 : vector<8x128xf32>
    %cst_32 = arith.constant 0.000000e+00 : f32
    %303 = vector.broadcast %cst_32 : f32 to vector<8x128xf32>
    %304 = arith.maximumf %302, %303 : vector<8x128xf32>
    %c12_33 = arith.constant 12 : index
    %305 = memref.load %arg3[%c12_33] : memref<16xf32, #tpu.memory_space<smem>>
    %c60 = arith.constant 60 : index
    %306 = memref.load %arg2[%c60] : memref<80xf32, #tpu.memory_space<smem>>
    %307 = vector.broadcast %306 : f32 to vector<8x128xf32>
    %308 = arith.mulf %307, %4 : vector<8x128xf32>
    %309 = vector.broadcast %305 : f32 to vector<8x128xf32>
    %310 = arith.addf %309, %308 : vector<8x128xf32>
    %c61 = arith.constant 61 : index
    %311 = memref.load %arg2[%c61] : memref<80xf32, #tpu.memory_space<smem>>
    %312 = vector.broadcast %311 : f32 to vector<8x128xf32>
    %313 = arith.mulf %312, %7 : vector<8x128xf32>
    %314 = arith.addf %310, %313 : vector<8x128xf32>
    %c62 = arith.constant 62 : index
    %315 = memref.load %arg2[%c62] : memref<80xf32, #tpu.memory_space<smem>>
    %316 = vector.broadcast %315 : f32 to vector<8x128xf32>
    %317 = arith.mulf %316, %10 : vector<8x128xf32>
    %318 = arith.addf %314, %317 : vector<8x128xf32>
    %c63 = arith.constant 63 : index
    %319 = memref.load %arg2[%c63] : memref<80xf32, #tpu.memory_space<smem>>
    %320 = vector.broadcast %319 : f32 to vector<8x128xf32>
    %321 = arith.mulf %320, %13 : vector<8x128xf32>
    %322 = arith.addf %318, %321 : vector<8x128xf32>
    %c64 = arith.constant 64 : index
    %323 = memref.load %arg2[%c64] : memref<80xf32, #tpu.memory_space<smem>>
    %324 = vector.broadcast %323 : f32 to vector<8x128xf32>
    %325 = arith.mulf %324, %16 : vector<8x128xf32>
    %326 = arith.addf %322, %325 : vector<8x128xf32>
    %cst_34 = arith.constant 0.000000e+00 : f32
    %327 = vector.broadcast %cst_34 : f32 to vector<8x128xf32>
    %328 = arith.maximumf %326, %327 : vector<8x128xf32>
    %c13_35 = arith.constant 13 : index
    %329 = memref.load %arg3[%c13_35] : memref<16xf32, #tpu.memory_space<smem>>
    %c65 = arith.constant 65 : index
    %330 = memref.load %arg2[%c65] : memref<80xf32, #tpu.memory_space<smem>>
    %331 = vector.broadcast %330 : f32 to vector<8x128xf32>
    %332 = arith.mulf %331, %4 : vector<8x128xf32>
    %333 = vector.broadcast %329 : f32 to vector<8x128xf32>
    %334 = arith.addf %333, %332 : vector<8x128xf32>
    %c66 = arith.constant 66 : index
    %335 = memref.load %arg2[%c66] : memref<80xf32, #tpu.memory_space<smem>>
    %336 = vector.broadcast %335 : f32 to vector<8x128xf32>
    %337 = arith.mulf %336, %7 : vector<8x128xf32>
    %338 = arith.addf %334, %337 : vector<8x128xf32>
    %c67 = arith.constant 67 : index
    %339 = memref.load %arg2[%c67] : memref<80xf32, #tpu.memory_space<smem>>
    %340 = vector.broadcast %339 : f32 to vector<8x128xf32>
    %341 = arith.mulf %340, %10 : vector<8x128xf32>
    %342 = arith.addf %338, %341 : vector<8x128xf32>
    %c68 = arith.constant 68 : index
    %343 = memref.load %arg2[%c68] : memref<80xf32, #tpu.memory_space<smem>>
    %344 = vector.broadcast %343 : f32 to vector<8x128xf32>
    %345 = arith.mulf %344, %13 : vector<8x128xf32>
    %346 = arith.addf %342, %345 : vector<8x128xf32>
    %c69 = arith.constant 69 : index
    %347 = memref.load %arg2[%c69] : memref<80xf32, #tpu.memory_space<smem>>
    %348 = vector.broadcast %347 : f32 to vector<8x128xf32>
    %349 = arith.mulf %348, %16 : vector<8x128xf32>
    %350 = arith.addf %346, %349 : vector<8x128xf32>
    %cst_36 = arith.constant 0.000000e+00 : f32
    %351 = vector.broadcast %cst_36 : f32 to vector<8x128xf32>
    %352 = arith.maximumf %350, %351 : vector<8x128xf32>
    %c14_37 = arith.constant 14 : index
    %353 = memref.load %arg3[%c14_37] : memref<16xf32, #tpu.memory_space<smem>>
    %c70 = arith.constant 70 : index
    %354 = memref.load %arg2[%c70] : memref<80xf32, #tpu.memory_space<smem>>
    %355 = vector.broadcast %354 : f32 to vector<8x128xf32>
    %356 = arith.mulf %355, %4 : vector<8x128xf32>
    %357 = vector.broadcast %353 : f32 to vector<8x128xf32>
    %358 = arith.addf %357, %356 : vector<8x128xf32>
    %c71 = arith.constant 71 : index
    %359 = memref.load %arg2[%c71] : memref<80xf32, #tpu.memory_space<smem>>
    %360 = vector.broadcast %359 : f32 to vector<8x128xf32>
    %361 = arith.mulf %360, %7 : vector<8x128xf32>
    %362 = arith.addf %358, %361 : vector<8x128xf32>
    %c72 = arith.constant 72 : index
    %363 = memref.load %arg2[%c72] : memref<80xf32, #tpu.memory_space<smem>>
    %364 = vector.broadcast %363 : f32 to vector<8x128xf32>
    %365 = arith.mulf %364, %10 : vector<8x128xf32>
    %366 = arith.addf %362, %365 : vector<8x128xf32>
    %c73 = arith.constant 73 : index
    %367 = memref.load %arg2[%c73] : memref<80xf32, #tpu.memory_space<smem>>
    %368 = vector.broadcast %367 : f32 to vector<8x128xf32>
    %369 = arith.mulf %368, %13 : vector<8x128xf32>
    %370 = arith.addf %366, %369 : vector<8x128xf32>
    %c74 = arith.constant 74 : index
    %371 = memref.load %arg2[%c74] : memref<80xf32, #tpu.memory_space<smem>>
    %372 = vector.broadcast %371 : f32 to vector<8x128xf32>
    %373 = arith.mulf %372, %16 : vector<8x128xf32>
    %374 = arith.addf %370, %373 : vector<8x128xf32>
    %cst_38 = arith.constant 0.000000e+00 : f32
    %375 = vector.broadcast %cst_38 : f32 to vector<8x128xf32>
    %376 = arith.maximumf %374, %375 : vector<8x128xf32>
    %c15_39 = arith.constant 15 : index
    %377 = memref.load %arg3[%c15_39] : memref<16xf32, #tpu.memory_space<smem>>
    %c75 = arith.constant 75 : index
    %378 = memref.load %arg2[%c75] : memref<80xf32, #tpu.memory_space<smem>>
    %379 = vector.broadcast %378 : f32 to vector<8x128xf32>
    %380 = arith.mulf %379, %4 : vector<8x128xf32>
    %381 = vector.broadcast %377 : f32 to vector<8x128xf32>
    %382 = arith.addf %381, %380 : vector<8x128xf32>
    %c76 = arith.constant 76 : index
    %383 = memref.load %arg2[%c76] : memref<80xf32, #tpu.memory_space<smem>>
    %384 = vector.broadcast %383 : f32 to vector<8x128xf32>
    %385 = arith.mulf %384, %7 : vector<8x128xf32>
    %386 = arith.addf %382, %385 : vector<8x128xf32>
    %c77 = arith.constant 77 : index
    %387 = memref.load %arg2[%c77] : memref<80xf32, #tpu.memory_space<smem>>
    %388 = vector.broadcast %387 : f32 to vector<8x128xf32>
    %389 = arith.mulf %388, %10 : vector<8x128xf32>
    %390 = arith.addf %386, %389 : vector<8x128xf32>
    %c78 = arith.constant 78 : index
    %391 = memref.load %arg2[%c78] : memref<80xf32, #tpu.memory_space<smem>>
    %392 = vector.broadcast %391 : f32 to vector<8x128xf32>
    %393 = arith.mulf %392, %13 : vector<8x128xf32>
    %394 = arith.addf %390, %393 : vector<8x128xf32>
    %c79 = arith.constant 79 : index
    %395 = memref.load %arg2[%c79] : memref<80xf32, #tpu.memory_space<smem>>
    %396 = vector.broadcast %395 : f32 to vector<8x128xf32>
    %397 = arith.mulf %396, %16 : vector<8x128xf32>
    %398 = arith.addf %394, %397 : vector<8x128xf32>
    %cst_40 = arith.constant 0.000000e+00 : f32
    %399 = vector.broadcast %cst_40 : f32 to vector<8x128xf32>
    %400 = arith.maximumf %398, %399 : vector<8x128xf32>
    %c0_41 = arith.constant 0 : index
    %401 = memref.load %arg5[%c0_41] : memref<8xf32, #tpu.memory_space<smem>>
    %c0_42 = arith.constant 0 : index
    %402 = memref.load %arg4[%c0_42] : memref<128xf32, #tpu.memory_space<smem>>
    %403 = vector.broadcast %402 : f32 to vector<8x128xf32>
    %404 = arith.mulf %403, %40 : vector<8x128xf32>
    %405 = vector.broadcast %401 : f32 to vector<8x128xf32>
    %406 = arith.addf %405, %404 : vector<8x128xf32>
    %c1_43 = arith.constant 1 : index
    %407 = memref.load %arg4[%c1_43] : memref<128xf32, #tpu.memory_space<smem>>
    %408 = vector.broadcast %407 : f32 to vector<8x128xf32>
    %409 = arith.mulf %408, %64 : vector<8x128xf32>
    %410 = arith.addf %406, %409 : vector<8x128xf32>
    %c2_44 = arith.constant 2 : index
    %411 = memref.load %arg4[%c2_44] : memref<128xf32, #tpu.memory_space<smem>>
    %412 = vector.broadcast %411 : f32 to vector<8x128xf32>
    %413 = arith.mulf %412, %88 : vector<8x128xf32>
    %414 = arith.addf %410, %413 : vector<8x128xf32>
    %c3_45 = arith.constant 3 : index
    %415 = memref.load %arg4[%c3_45] : memref<128xf32, #tpu.memory_space<smem>>
    %416 = vector.broadcast %415 : f32 to vector<8x128xf32>
    %417 = arith.mulf %416, %112 : vector<8x128xf32>
    %418 = arith.addf %414, %417 : vector<8x128xf32>
    %c4_46 = arith.constant 4 : index
    %419 = memref.load %arg4[%c4_46] : memref<128xf32, #tpu.memory_space<smem>>
    %420 = vector.broadcast %419 : f32 to vector<8x128xf32>
    %421 = arith.mulf %420, %136 : vector<8x128xf32>
    %422 = arith.addf %418, %421 : vector<8x128xf32>
    %c5_47 = arith.constant 5 : index
    %423 = memref.load %arg4[%c5_47] : memref<128xf32, #tpu.memory_space<smem>>
    %424 = vector.broadcast %423 : f32 to vector<8x128xf32>
    %425 = arith.mulf %424, %160 : vector<8x128xf32>
    %426 = arith.addf %422, %425 : vector<8x128xf32>
    %c6_48 = arith.constant 6 : index
    %427 = memref.load %arg4[%c6_48] : memref<128xf32, #tpu.memory_space<smem>>
    %428 = vector.broadcast %427 : f32 to vector<8x128xf32>
    %429 = arith.mulf %428, %184 : vector<8x128xf32>
    %430 = arith.addf %426, %429 : vector<8x128xf32>
    %c7_49 = arith.constant 7 : index
    %431 = memref.load %arg4[%c7_49] : memref<128xf32, #tpu.memory_space<smem>>
    %432 = vector.broadcast %431 : f32 to vector<8x128xf32>
    %433 = arith.mulf %432, %208 : vector<8x128xf32>
    %434 = arith.addf %430, %433 : vector<8x128xf32>
    %c8_50 = arith.constant 8 : index
    %435 = memref.load %arg4[%c8_50] : memref<128xf32, #tpu.memory_space<smem>>
    %436 = vector.broadcast %435 : f32 to vector<8x128xf32>
    %437 = arith.mulf %436, %232 : vector<8x128xf32>
    %438 = arith.addf %434, %437 : vector<8x128xf32>
    %c9_51 = arith.constant 9 : index
    %439 = memref.load %arg4[%c9_51] : memref<128xf32, #tpu.memory_space<smem>>
    %440 = vector.broadcast %439 : f32 to vector<8x128xf32>
    %441 = arith.mulf %440, %256 : vector<8x128xf32>
    %442 = arith.addf %438, %441 : vector<8x128xf32>
    %c10_52 = arith.constant 10 : index
    %443 = memref.load %arg4[%c10_52] : memref<128xf32, #tpu.memory_space<smem>>
    %444 = vector.broadcast %443 : f32 to vector<8x128xf32>
    %445 = arith.mulf %444, %280 : vector<8x128xf32>
    %446 = arith.addf %442, %445 : vector<8x128xf32>
    %c11_53 = arith.constant 11 : index
    %447 = memref.load %arg4[%c11_53] : memref<128xf32, #tpu.memory_space<smem>>
    %448 = vector.broadcast %447 : f32 to vector<8x128xf32>
    %449 = arith.mulf %448, %304 : vector<8x128xf32>
    %450 = arith.addf %446, %449 : vector<8x128xf32>
    %c12_54 = arith.constant 12 : index
    %451 = memref.load %arg4[%c12_54] : memref<128xf32, #tpu.memory_space<smem>>
    %452 = vector.broadcast %451 : f32 to vector<8x128xf32>
    %453 = arith.mulf %452, %328 : vector<8x128xf32>
    %454 = arith.addf %450, %453 : vector<8x128xf32>
    %c13_55 = arith.constant 13 : index
    %455 = memref.load %arg4[%c13_55] : memref<128xf32, #tpu.memory_space<smem>>
    %456 = vector.broadcast %455 : f32 to vector<8x128xf32>
    %457 = arith.mulf %456, %352 : vector<8x128xf32>
    %458 = arith.addf %454, %457 : vector<8x128xf32>
    %c14_56 = arith.constant 14 : index
    %459 = memref.load %arg4[%c14_56] : memref<128xf32, #tpu.memory_space<smem>>
    %460 = vector.broadcast %459 : f32 to vector<8x128xf32>
    %461 = arith.mulf %460, %376 : vector<8x128xf32>
    %462 = arith.addf %458, %461 : vector<8x128xf32>
    %c15_57 = arith.constant 15 : index
    %463 = memref.load %arg4[%c15_57] : memref<128xf32, #tpu.memory_space<smem>>
    %464 = vector.broadcast %463 : f32 to vector<8x128xf32>
    %465 = arith.mulf %464, %400 : vector<8x128xf32>
    %466 = arith.addf %462, %465 : vector<8x128xf32>
    %cst_58 = arith.constant 0.000000e+00 : f32
    %467 = vector.broadcast %cst_58 : f32 to vector<8x128xf32>
    %468 = arith.maximumf %466, %467 : vector<8x128xf32>
    %c1_59 = arith.constant 1 : index
    %469 = memref.load %arg5[%c1_59] : memref<8xf32, #tpu.memory_space<smem>>
    %c16_60 = arith.constant 16 : index
    %470 = memref.load %arg4[%c16_60] : memref<128xf32, #tpu.memory_space<smem>>
    %471 = vector.broadcast %470 : f32 to vector<8x128xf32>
    %472 = arith.mulf %471, %40 : vector<8x128xf32>
    %473 = vector.broadcast %469 : f32 to vector<8x128xf32>
    %474 = arith.addf %473, %472 : vector<8x128xf32>
    %c17_61 = arith.constant 17 : index
    %475 = memref.load %arg4[%c17_61] : memref<128xf32, #tpu.memory_space<smem>>
    %476 = vector.broadcast %475 : f32 to vector<8x128xf32>
    %477 = arith.mulf %476, %64 : vector<8x128xf32>
    %478 = arith.addf %474, %477 : vector<8x128xf32>
    %c18_62 = arith.constant 18 : index
    %479 = memref.load %arg4[%c18_62] : memref<128xf32, #tpu.memory_space<smem>>
    %480 = vector.broadcast %479 : f32 to vector<8x128xf32>
    %481 = arith.mulf %480, %88 : vector<8x128xf32>
    %482 = arith.addf %478, %481 : vector<8x128xf32>
    %c19_63 = arith.constant 19 : index
    %483 = memref.load %arg4[%c19_63] : memref<128xf32, #tpu.memory_space<smem>>
    %484 = vector.broadcast %483 : f32 to vector<8x128xf32>
    %485 = arith.mulf %484, %112 : vector<8x128xf32>
    %486 = arith.addf %482, %485 : vector<8x128xf32>
    %c20_64 = arith.constant 20 : index
    %487 = memref.load %arg4[%c20_64] : memref<128xf32, #tpu.memory_space<smem>>
    %488 = vector.broadcast %487 : f32 to vector<8x128xf32>
    %489 = arith.mulf %488, %136 : vector<8x128xf32>
    %490 = arith.addf %486, %489 : vector<8x128xf32>
    %c21_65 = arith.constant 21 : index
    %491 = memref.load %arg4[%c21_65] : memref<128xf32, #tpu.memory_space<smem>>
    %492 = vector.broadcast %491 : f32 to vector<8x128xf32>
    %493 = arith.mulf %492, %160 : vector<8x128xf32>
    %494 = arith.addf %490, %493 : vector<8x128xf32>
    %c22_66 = arith.constant 22 : index
    %495 = memref.load %arg4[%c22_66] : memref<128xf32, #tpu.memory_space<smem>>
    %496 = vector.broadcast %495 : f32 to vector<8x128xf32>
    %497 = arith.mulf %496, %184 : vector<8x128xf32>
    %498 = arith.addf %494, %497 : vector<8x128xf32>
    %c23_67 = arith.constant 23 : index
    %499 = memref.load %arg4[%c23_67] : memref<128xf32, #tpu.memory_space<smem>>
    %500 = vector.broadcast %499 : f32 to vector<8x128xf32>
    %501 = arith.mulf %500, %208 : vector<8x128xf32>
    %502 = arith.addf %498, %501 : vector<8x128xf32>
    %c24_68 = arith.constant 24 : index
    %503 = memref.load %arg4[%c24_68] : memref<128xf32, #tpu.memory_space<smem>>
    %504 = vector.broadcast %503 : f32 to vector<8x128xf32>
    %505 = arith.mulf %504, %232 : vector<8x128xf32>
    %506 = arith.addf %502, %505 : vector<8x128xf32>
    %c25_69 = arith.constant 25 : index
    %507 = memref.load %arg4[%c25_69] : memref<128xf32, #tpu.memory_space<smem>>
    %508 = vector.broadcast %507 : f32 to vector<8x128xf32>
    %509 = arith.mulf %508, %256 : vector<8x128xf32>
    %510 = arith.addf %506, %509 : vector<8x128xf32>
    %c26_70 = arith.constant 26 : index
    %511 = memref.load %arg4[%c26_70] : memref<128xf32, #tpu.memory_space<smem>>
    %512 = vector.broadcast %511 : f32 to vector<8x128xf32>
    %513 = arith.mulf %512, %280 : vector<8x128xf32>
    %514 = arith.addf %510, %513 : vector<8x128xf32>
    %c27_71 = arith.constant 27 : index
    %515 = memref.load %arg4[%c27_71] : memref<128xf32, #tpu.memory_space<smem>>
    %516 = vector.broadcast %515 : f32 to vector<8x128xf32>
    %517 = arith.mulf %516, %304 : vector<8x128xf32>
    %518 = arith.addf %514, %517 : vector<8x128xf32>
    %c28_72 = arith.constant 28 : index
    %519 = memref.load %arg4[%c28_72] : memref<128xf32, #tpu.memory_space<smem>>
    %520 = vector.broadcast %519 : f32 to vector<8x128xf32>
    %521 = arith.mulf %520, %328 : vector<8x128xf32>
    %522 = arith.addf %518, %521 : vector<8x128xf32>
    %c29_73 = arith.constant 29 : index
    %523 = memref.load %arg4[%c29_73] : memref<128xf32, #tpu.memory_space<smem>>
    %524 = vector.broadcast %523 : f32 to vector<8x128xf32>
    %525 = arith.mulf %524, %352 : vector<8x128xf32>
    %526 = arith.addf %522, %525 : vector<8x128xf32>
    %c30_74 = arith.constant 30 : index
    %527 = memref.load %arg4[%c30_74] : memref<128xf32, #tpu.memory_space<smem>>
    %528 = vector.broadcast %527 : f32 to vector<8x128xf32>
    %529 = arith.mulf %528, %376 : vector<8x128xf32>
    %530 = arith.addf %526, %529 : vector<8x128xf32>
    %c31_75 = arith.constant 31 : index
    %531 = memref.load %arg4[%c31_75] : memref<128xf32, #tpu.memory_space<smem>>
    %532 = vector.broadcast %531 : f32 to vector<8x128xf32>
    %533 = arith.mulf %532, %400 : vector<8x128xf32>
    %534 = arith.addf %530, %533 : vector<8x128xf32>
    %cst_76 = arith.constant 0.000000e+00 : f32
    %535 = vector.broadcast %cst_76 : f32 to vector<8x128xf32>
    %536 = arith.maximumf %534, %535 : vector<8x128xf32>
    %c2_77 = arith.constant 2 : index
    %537 = memref.load %arg5[%c2_77] : memref<8xf32, #tpu.memory_space<smem>>
    %c32_78 = arith.constant 32 : index
    %538 = memref.load %arg4[%c32_78] : memref<128xf32, #tpu.memory_space<smem>>
    %539 = vector.broadcast %538 : f32 to vector<8x128xf32>
    %540 = arith.mulf %539, %40 : vector<8x128xf32>
    %541 = vector.broadcast %537 : f32 to vector<8x128xf32>
    %542 = arith.addf %541, %540 : vector<8x128xf32>
    %c33_79 = arith.constant 33 : index
    %543 = memref.load %arg4[%c33_79] : memref<128xf32, #tpu.memory_space<smem>>
    %544 = vector.broadcast %543 : f32 to vector<8x128xf32>
    %545 = arith.mulf %544, %64 : vector<8x128xf32>
    %546 = arith.addf %542, %545 : vector<8x128xf32>
    %c34_80 = arith.constant 34 : index
    %547 = memref.load %arg4[%c34_80] : memref<128xf32, #tpu.memory_space<smem>>
    %548 = vector.broadcast %547 : f32 to vector<8x128xf32>
    %549 = arith.mulf %548, %88 : vector<8x128xf32>
    %550 = arith.addf %546, %549 : vector<8x128xf32>
    %c35_81 = arith.constant 35 : index
    %551 = memref.load %arg4[%c35_81] : memref<128xf32, #tpu.memory_space<smem>>
    %552 = vector.broadcast %551 : f32 to vector<8x128xf32>
    %553 = arith.mulf %552, %112 : vector<8x128xf32>
    %554 = arith.addf %550, %553 : vector<8x128xf32>
    %c36_82 = arith.constant 36 : index
    %555 = memref.load %arg4[%c36_82] : memref<128xf32, #tpu.memory_space<smem>>
    %556 = vector.broadcast %555 : f32 to vector<8x128xf32>
    %557 = arith.mulf %556, %136 : vector<8x128xf32>
    %558 = arith.addf %554, %557 : vector<8x128xf32>
    %c37_83 = arith.constant 37 : index
    %559 = memref.load %arg4[%c37_83] : memref<128xf32, #tpu.memory_space<smem>>
    %560 = vector.broadcast %559 : f32 to vector<8x128xf32>
    %561 = arith.mulf %560, %160 : vector<8x128xf32>
    %562 = arith.addf %558, %561 : vector<8x128xf32>
    %c38_84 = arith.constant 38 : index
    %563 = memref.load %arg4[%c38_84] : memref<128xf32, #tpu.memory_space<smem>>
    %564 = vector.broadcast %563 : f32 to vector<8x128xf32>
    %565 = arith.mulf %564, %184 : vector<8x128xf32>
    %566 = arith.addf %562, %565 : vector<8x128xf32>
    %c39_85 = arith.constant 39 : index
    %567 = memref.load %arg4[%c39_85] : memref<128xf32, #tpu.memory_space<smem>>
    %568 = vector.broadcast %567 : f32 to vector<8x128xf32>
    %569 = arith.mulf %568, %208 : vector<8x128xf32>
    %570 = arith.addf %566, %569 : vector<8x128xf32>
    %c40_86 = arith.constant 40 : index
    %571 = memref.load %arg4[%c40_86] : memref<128xf32, #tpu.memory_space<smem>>
    %572 = vector.broadcast %571 : f32 to vector<8x128xf32>
    %573 = arith.mulf %572, %232 : vector<8x128xf32>
    %574 = arith.addf %570, %573 : vector<8x128xf32>
    %c41_87 = arith.constant 41 : index
    %575 = memref.load %arg4[%c41_87] : memref<128xf32, #tpu.memory_space<smem>>
    %576 = vector.broadcast %575 : f32 to vector<8x128xf32>
    %577 = arith.mulf %576, %256 : vector<8x128xf32>
    %578 = arith.addf %574, %577 : vector<8x128xf32>
    %c42_88 = arith.constant 42 : index
    %579 = memref.load %arg4[%c42_88] : memref<128xf32, #tpu.memory_space<smem>>
    %580 = vector.broadcast %579 : f32 to vector<8x128xf32>
    %581 = arith.mulf %580, %280 : vector<8x128xf32>
    %582 = arith.addf %578, %581 : vector<8x128xf32>
    %c43_89 = arith.constant 43 : index
    %583 = memref.load %arg4[%c43_89] : memref<128xf32, #tpu.memory_space<smem>>
    %584 = vector.broadcast %583 : f32 to vector<8x128xf32>
    %585 = arith.mulf %584, %304 : vector<8x128xf32>
    %586 = arith.addf %582, %585 : vector<8x128xf32>
    %c44_90 = arith.constant 44 : index
    %587 = memref.load %arg4[%c44_90] : memref<128xf32, #tpu.memory_space<smem>>
    %588 = vector.broadcast %587 : f32 to vector<8x128xf32>
    %589 = arith.mulf %588, %328 : vector<8x128xf32>
    %590 = arith.addf %586, %589 : vector<8x128xf32>
    %c45_91 = arith.constant 45 : index
    %591 = memref.load %arg4[%c45_91] : memref<128xf32, #tpu.memory_space<smem>>
    %592 = vector.broadcast %591 : f32 to vector<8x128xf32>
    %593 = arith.mulf %592, %352 : vector<8x128xf32>
    %594 = arith.addf %590, %593 : vector<8x128xf32>
    %c46_92 = arith.constant 46 : index
    %595 = memref.load %arg4[%c46_92] : memref<128xf32, #tpu.memory_space<smem>>
    %596 = vector.broadcast %595 : f32 to vector<8x128xf32>
    %597 = arith.mulf %596, %376 : vector<8x128xf32>
    %598 = arith.addf %594, %597 : vector<8x128xf32>
    %c47_93 = arith.constant 47 : index
    %599 = memref.load %arg4[%c47_93] : memref<128xf32, #tpu.memory_space<smem>>
    %600 = vector.broadcast %599 : f32 to vector<8x128xf32>
    %601 = arith.mulf %600, %400 : vector<8x128xf32>
    %602 = arith.addf %598, %601 : vector<8x128xf32>
    %cst_94 = arith.constant 0.000000e+00 : f32
    %603 = vector.broadcast %cst_94 : f32 to vector<8x128xf32>
    %604 = arith.maximumf %602, %603 : vector<8x128xf32>
    %c3_95 = arith.constant 3 : index
    %605 = memref.load %arg5[%c3_95] : memref<8xf32, #tpu.memory_space<smem>>
    %c48_96 = arith.constant 48 : index
    %606 = memref.load %arg4[%c48_96] : memref<128xf32, #tpu.memory_space<smem>>
    %607 = vector.broadcast %606 : f32 to vector<8x128xf32>
    %608 = arith.mulf %607, %40 : vector<8x128xf32>
    %609 = vector.broadcast %605 : f32 to vector<8x128xf32>
    %610 = arith.addf %609, %608 : vector<8x128xf32>
    %c49_97 = arith.constant 49 : index
    %611 = memref.load %arg4[%c49_97] : memref<128xf32, #tpu.memory_space<smem>>
    %612 = vector.broadcast %611 : f32 to vector<8x128xf32>
    %613 = arith.mulf %612, %64 : vector<8x128xf32>
    %614 = arith.addf %610, %613 : vector<8x128xf32>
    %c50_98 = arith.constant 50 : index
    %615 = memref.load %arg4[%c50_98] : memref<128xf32, #tpu.memory_space<smem>>
    %616 = vector.broadcast %615 : f32 to vector<8x128xf32>
    %617 = arith.mulf %616, %88 : vector<8x128xf32>
    %618 = arith.addf %614, %617 : vector<8x128xf32>
    %c51_99 = arith.constant 51 : index
    %619 = memref.load %arg4[%c51_99] : memref<128xf32, #tpu.memory_space<smem>>
    %620 = vector.broadcast %619 : f32 to vector<8x128xf32>
    %621 = arith.mulf %620, %112 : vector<8x128xf32>
    %622 = arith.addf %618, %621 : vector<8x128xf32>
    %c52_100 = arith.constant 52 : index
    %623 = memref.load %arg4[%c52_100] : memref<128xf32, #tpu.memory_space<smem>>
    %624 = vector.broadcast %623 : f32 to vector<8x128xf32>
    %625 = arith.mulf %624, %136 : vector<8x128xf32>
    %626 = arith.addf %622, %625 : vector<8x128xf32>
    %c53_101 = arith.constant 53 : index
    %627 = memref.load %arg4[%c53_101] : memref<128xf32, #tpu.memory_space<smem>>
    %628 = vector.broadcast %627 : f32 to vector<8x128xf32>
    %629 = arith.mulf %628, %160 : vector<8x128xf32>
    %630 = arith.addf %626, %629 : vector<8x128xf32>
    %c54_102 = arith.constant 54 : index
    %631 = memref.load %arg4[%c54_102] : memref<128xf32, #tpu.memory_space<smem>>
    %632 = vector.broadcast %631 : f32 to vector<8x128xf32>
    %633 = arith.mulf %632, %184 : vector<8x128xf32>
    %634 = arith.addf %630, %633 : vector<8x128xf32>
    %c55_103 = arith.constant 55 : index
    %635 = memref.load %arg4[%c55_103] : memref<128xf32, #tpu.memory_space<smem>>
    %636 = vector.broadcast %635 : f32 to vector<8x128xf32>
    %637 = arith.mulf %636, %208 : vector<8x128xf32>
    %638 = arith.addf %634, %637 : vector<8x128xf32>
    %c56_104 = arith.constant 56 : index
    %639 = memref.load %arg4[%c56_104] : memref<128xf32, #tpu.memory_space<smem>>
    %640 = vector.broadcast %639 : f32 to vector<8x128xf32>
    %641 = arith.mulf %640, %232 : vector<8x128xf32>
    %642 = arith.addf %638, %641 : vector<8x128xf32>
    %c57_105 = arith.constant 57 : index
    %643 = memref.load %arg4[%c57_105] : memref<128xf32, #tpu.memory_space<smem>>
    %644 = vector.broadcast %643 : f32 to vector<8x128xf32>
    %645 = arith.mulf %644, %256 : vector<8x128xf32>
    %646 = arith.addf %642, %645 : vector<8x128xf32>
    %c58_106 = arith.constant 58 : index
    %647 = memref.load %arg4[%c58_106] : memref<128xf32, #tpu.memory_space<smem>>
    %648 = vector.broadcast %647 : f32 to vector<8x128xf32>
    %649 = arith.mulf %648, %280 : vector<8x128xf32>
    %650 = arith.addf %646, %649 : vector<8x128xf32>
    %c59_107 = arith.constant 59 : index
    %651 = memref.load %arg4[%c59_107] : memref<128xf32, #tpu.memory_space<smem>>
    %652 = vector.broadcast %651 : f32 to vector<8x128xf32>
    %653 = arith.mulf %652, %304 : vector<8x128xf32>
    %654 = arith.addf %650, %653 : vector<8x128xf32>
    %c60_108 = arith.constant 60 : index
    %655 = memref.load %arg4[%c60_108] : memref<128xf32, #tpu.memory_space<smem>>
    %656 = vector.broadcast %655 : f32 to vector<8x128xf32>
    %657 = arith.mulf %656, %328 : vector<8x128xf32>
    %658 = arith.addf %654, %657 : vector<8x128xf32>
    %c61_109 = arith.constant 61 : index
    %659 = memref.load %arg4[%c61_109] : memref<128xf32, #tpu.memory_space<smem>>
    %660 = vector.broadcast %659 : f32 to vector<8x128xf32>
    %661 = arith.mulf %660, %352 : vector<8x128xf32>
    %662 = arith.addf %658, %661 : vector<8x128xf32>
    %c62_110 = arith.constant 62 : index
    %663 = memref.load %arg4[%c62_110] : memref<128xf32, #tpu.memory_space<smem>>
    %664 = vector.broadcast %663 : f32 to vector<8x128xf32>
    %665 = arith.mulf %664, %376 : vector<8x128xf32>
    %666 = arith.addf %662, %665 : vector<8x128xf32>
    %c63_111 = arith.constant 63 : index
    %667 = memref.load %arg4[%c63_111] : memref<128xf32, #tpu.memory_space<smem>>
    %668 = vector.broadcast %667 : f32 to vector<8x128xf32>
    %669 = arith.mulf %668, %400 : vector<8x128xf32>
    %670 = arith.addf %666, %669 : vector<8x128xf32>
    %cst_112 = arith.constant 0.000000e+00 : f32
    %671 = vector.broadcast %cst_112 : f32 to vector<8x128xf32>
    %672 = arith.maximumf %670, %671 : vector<8x128xf32>
    %c4_113 = arith.constant 4 : index
    %673 = memref.load %arg5[%c4_113] : memref<8xf32, #tpu.memory_space<smem>>
    %c64_114 = arith.constant 64 : index
    %674 = memref.load %arg4[%c64_114] : memref<128xf32, #tpu.memory_space<smem>>
    %675 = vector.broadcast %674 : f32 to vector<8x128xf32>
    %676 = arith.mulf %675, %40 : vector<8x128xf32>
    %677 = vector.broadcast %673 : f32 to vector<8x128xf32>
    %678 = arith.addf %677, %676 : vector<8x128xf32>
    %c65_115 = arith.constant 65 : index
    %679 = memref.load %arg4[%c65_115] : memref<128xf32, #tpu.memory_space<smem>>
    %680 = vector.broadcast %679 : f32 to vector<8x128xf32>
    %681 = arith.mulf %680, %64 : vector<8x128xf32>
    %682 = arith.addf %678, %681 : vector<8x128xf32>
    %c66_116 = arith.constant 66 : index
    %683 = memref.load %arg4[%c66_116] : memref<128xf32, #tpu.memory_space<smem>>
    %684 = vector.broadcast %683 : f32 to vector<8x128xf32>
    %685 = arith.mulf %684, %88 : vector<8x128xf32>
    %686 = arith.addf %682, %685 : vector<8x128xf32>
    %c67_117 = arith.constant 67 : index
    %687 = memref.load %arg4[%c67_117] : memref<128xf32, #tpu.memory_space<smem>>
    %688 = vector.broadcast %687 : f32 to vector<8x128xf32>
    %689 = arith.mulf %688, %112 : vector<8x128xf32>
    %690 = arith.addf %686, %689 : vector<8x128xf32>
    %c68_118 = arith.constant 68 : index
    %691 = memref.load %arg4[%c68_118] : memref<128xf32, #tpu.memory_space<smem>>
    %692 = vector.broadcast %691 : f32 to vector<8x128xf32>
    %693 = arith.mulf %692, %136 : vector<8x128xf32>
    %694 = arith.addf %690, %693 : vector<8x128xf32>
    %c69_119 = arith.constant 69 : index
    %695 = memref.load %arg4[%c69_119] : memref<128xf32, #tpu.memory_space<smem>>
    %696 = vector.broadcast %695 : f32 to vector<8x128xf32>
    %697 = arith.mulf %696, %160 : vector<8x128xf32>
    %698 = arith.addf %694, %697 : vector<8x128xf32>
    %c70_120 = arith.constant 70 : index
    %699 = memref.load %arg4[%c70_120] : memref<128xf32, #tpu.memory_space<smem>>
    %700 = vector.broadcast %699 : f32 to vector<8x128xf32>
    %701 = arith.mulf %700, %184 : vector<8x128xf32>
    %702 = arith.addf %698, %701 : vector<8x128xf32>
    %c71_121 = arith.constant 71 : index
    %703 = memref.load %arg4[%c71_121] : memref<128xf32, #tpu.memory_space<smem>>
    %704 = vector.broadcast %703 : f32 to vector<8x128xf32>
    %705 = arith.mulf %704, %208 : vector<8x128xf32>
    %706 = arith.addf %702, %705 : vector<8x128xf32>
    %c72_122 = arith.constant 72 : index
    %707 = memref.load %arg4[%c72_122] : memref<128xf32, #tpu.memory_space<smem>>
    %708 = vector.broadcast %707 : f32 to vector<8x128xf32>
    %709 = arith.mulf %708, %232 : vector<8x128xf32>
    %710 = arith.addf %706, %709 : vector<8x128xf32>
    %c73_123 = arith.constant 73 : index
    %711 = memref.load %arg4[%c73_123] : memref<128xf32, #tpu.memory_space<smem>>
    %712 = vector.broadcast %711 : f32 to vector<8x128xf32>
    %713 = arith.mulf %712, %256 : vector<8x128xf32>
    %714 = arith.addf %710, %713 : vector<8x128xf32>
    %c74_124 = arith.constant 74 : index
    %715 = memref.load %arg4[%c74_124] : memref<128xf32, #tpu.memory_space<smem>>
    %716 = vector.broadcast %715 : f32 to vector<8x128xf32>
    %717 = arith.mulf %716, %280 : vector<8x128xf32>
    %718 = arith.addf %714, %717 : vector<8x128xf32>
    %c75_125 = arith.constant 75 : index
    %719 = memref.load %arg4[%c75_125] : memref<128xf32, #tpu.memory_space<smem>>
    %720 = vector.broadcast %719 : f32 to vector<8x128xf32>
    %721 = arith.mulf %720, %304 : vector<8x128xf32>
    %722 = arith.addf %718, %721 : vector<8x128xf32>
    %c76_126 = arith.constant 76 : index
    %723 = memref.load %arg4[%c76_126] : memref<128xf32, #tpu.memory_space<smem>>
    %724 = vector.broadcast %723 : f32 to vector<8x128xf32>
    %725 = arith.mulf %724, %328 : vector<8x128xf32>
    %726 = arith.addf %722, %725 : vector<8x128xf32>
    %c77_127 = arith.constant 77 : index
    %727 = memref.load %arg4[%c77_127] : memref<128xf32, #tpu.memory_space<smem>>
    %728 = vector.broadcast %727 : f32 to vector<8x128xf32>
    %729 = arith.mulf %728, %352 : vector<8x128xf32>
    %730 = arith.addf %726, %729 : vector<8x128xf32>
    %c78_128 = arith.constant 78 : index
    %731 = memref.load %arg4[%c78_128] : memref<128xf32, #tpu.memory_space<smem>>
    %732 = vector.broadcast %731 : f32 to vector<8x128xf32>
    %733 = arith.mulf %732, %376 : vector<8x128xf32>
    %734 = arith.addf %730, %733 : vector<8x128xf32>
    %c79_129 = arith.constant 79 : index
    %735 = memref.load %arg4[%c79_129] : memref<128xf32, #tpu.memory_space<smem>>
    %736 = vector.broadcast %735 : f32 to vector<8x128xf32>
    %737 = arith.mulf %736, %400 : vector<8x128xf32>
    %738 = arith.addf %734, %737 : vector<8x128xf32>
    %cst_130 = arith.constant 0.000000e+00 : f32
    %739 = vector.broadcast %cst_130 : f32 to vector<8x128xf32>
    %740 = arith.maximumf %738, %739 : vector<8x128xf32>
    %c5_131 = arith.constant 5 : index
    %741 = memref.load %arg5[%c5_131] : memref<8xf32, #tpu.memory_space<smem>>
    %c80 = arith.constant 80 : index
    %742 = memref.load %arg4[%c80] : memref<128xf32, #tpu.memory_space<smem>>
    %743 = vector.broadcast %742 : f32 to vector<8x128xf32>
    %744 = arith.mulf %743, %40 : vector<8x128xf32>
    %745 = vector.broadcast %741 : f32 to vector<8x128xf32>
    %746 = arith.addf %745, %744 : vector<8x128xf32>
    %c81 = arith.constant 81 : index
    %747 = memref.load %arg4[%c81] : memref<128xf32, #tpu.memory_space<smem>>
    %748 = vector.broadcast %747 : f32 to vector<8x128xf32>
    %749 = arith.mulf %748, %64 : vector<8x128xf32>
    %750 = arith.addf %746, %749 : vector<8x128xf32>
    %c82 = arith.constant 82 : index
    %751 = memref.load %arg4[%c82] : memref<128xf32, #tpu.memory_space<smem>>
    %752 = vector.broadcast %751 : f32 to vector<8x128xf32>
    %753 = arith.mulf %752, %88 : vector<8x128xf32>
    %754 = arith.addf %750, %753 : vector<8x128xf32>
    %c83 = arith.constant 83 : index
    %755 = memref.load %arg4[%c83] : memref<128xf32, #tpu.memory_space<smem>>
    %756 = vector.broadcast %755 : f32 to vector<8x128xf32>
    %757 = arith.mulf %756, %112 : vector<8x128xf32>
    %758 = arith.addf %754, %757 : vector<8x128xf32>
    %c84 = arith.constant 84 : index
    %759 = memref.load %arg4[%c84] : memref<128xf32, #tpu.memory_space<smem>>
    %760 = vector.broadcast %759 : f32 to vector<8x128xf32>
    %761 = arith.mulf %760, %136 : vector<8x128xf32>
    %762 = arith.addf %758, %761 : vector<8x128xf32>
    %c85 = arith.constant 85 : index
    %763 = memref.load %arg4[%c85] : memref<128xf32, #tpu.memory_space<smem>>
    %764 = vector.broadcast %763 : f32 to vector<8x128xf32>
    %765 = arith.mulf %764, %160 : vector<8x128xf32>
    %766 = arith.addf %762, %765 : vector<8x128xf32>
    %c86 = arith.constant 86 : index
    %767 = memref.load %arg4[%c86] : memref<128xf32, #tpu.memory_space<smem>>
    %768 = vector.broadcast %767 : f32 to vector<8x128xf32>
    %769 = arith.mulf %768, %184 : vector<8x128xf32>
    %770 = arith.addf %766, %769 : vector<8x128xf32>
    %c87 = arith.constant 87 : index
    %771 = memref.load %arg4[%c87] : memref<128xf32, #tpu.memory_space<smem>>
    %772 = vector.broadcast %771 : f32 to vector<8x128xf32>
    %773 = arith.mulf %772, %208 : vector<8x128xf32>
    %774 = arith.addf %770, %773 : vector<8x128xf32>
    %c88 = arith.constant 88 : index
    %775 = memref.load %arg4[%c88] : memref<128xf32, #tpu.memory_space<smem>>
    %776 = vector.broadcast %775 : f32 to vector<8x128xf32>
    %777 = arith.mulf %776, %232 : vector<8x128xf32>
    %778 = arith.addf %774, %777 : vector<8x128xf32>
    %c89 = arith.constant 89 : index
    %779 = memref.load %arg4[%c89] : memref<128xf32, #tpu.memory_space<smem>>
    %780 = vector.broadcast %779 : f32 to vector<8x128xf32>
    %781 = arith.mulf %780, %256 : vector<8x128xf32>
    %782 = arith.addf %778, %781 : vector<8x128xf32>
    %c90 = arith.constant 90 : index
    %783 = memref.load %arg4[%c90] : memref<128xf32, #tpu.memory_space<smem>>
    %784 = vector.broadcast %783 : f32 to vector<8x128xf32>
    %785 = arith.mulf %784, %280 : vector<8x128xf32>
    %786 = arith.addf %782, %785 : vector<8x128xf32>
    %c91 = arith.constant 91 : index
    %787 = memref.load %arg4[%c91] : memref<128xf32, #tpu.memory_space<smem>>
    %788 = vector.broadcast %787 : f32 to vector<8x128xf32>
    %789 = arith.mulf %788, %304 : vector<8x128xf32>
    %790 = arith.addf %786, %789 : vector<8x128xf32>
    %c92 = arith.constant 92 : index
    %791 = memref.load %arg4[%c92] : memref<128xf32, #tpu.memory_space<smem>>
    %792 = vector.broadcast %791 : f32 to vector<8x128xf32>
    %793 = arith.mulf %792, %328 : vector<8x128xf32>
    %794 = arith.addf %790, %793 : vector<8x128xf32>
    %c93 = arith.constant 93 : index
    %795 = memref.load %arg4[%c93] : memref<128xf32, #tpu.memory_space<smem>>
    %796 = vector.broadcast %795 : f32 to vector<8x128xf32>
    %797 = arith.mulf %796, %352 : vector<8x128xf32>
    %798 = arith.addf %794, %797 : vector<8x128xf32>
    %c94 = arith.constant 94 : index
    %799 = memref.load %arg4[%c94] : memref<128xf32, #tpu.memory_space<smem>>
    %800 = vector.broadcast %799 : f32 to vector<8x128xf32>
    %801 = arith.mulf %800, %376 : vector<8x128xf32>
    %802 = arith.addf %798, %801 : vector<8x128xf32>
    %c95 = arith.constant 95 : index
    %803 = memref.load %arg4[%c95] : memref<128xf32, #tpu.memory_space<smem>>
    %804 = vector.broadcast %803 : f32 to vector<8x128xf32>
    %805 = arith.mulf %804, %400 : vector<8x128xf32>
    %806 = arith.addf %802, %805 : vector<8x128xf32>
    %cst_132 = arith.constant 0.000000e+00 : f32
    %807 = vector.broadcast %cst_132 : f32 to vector<8x128xf32>
    %808 = arith.maximumf %806, %807 : vector<8x128xf32>
    %c6_133 = arith.constant 6 : index
    %809 = memref.load %arg5[%c6_133] : memref<8xf32, #tpu.memory_space<smem>>
    %c96 = arith.constant 96 : index
    %810 = memref.load %arg4[%c96] : memref<128xf32, #tpu.memory_space<smem>>
    %811 = vector.broadcast %810 : f32 to vector<8x128xf32>
    %812 = arith.mulf %811, %40 : vector<8x128xf32>
    %813 = vector.broadcast %809 : f32 to vector<8x128xf32>
    %814 = arith.addf %813, %812 : vector<8x128xf32>
    %c97 = arith.constant 97 : index
    %815 = memref.load %arg4[%c97] : memref<128xf32, #tpu.memory_space<smem>>
    %816 = vector.broadcast %815 : f32 to vector<8x128xf32>
    %817 = arith.mulf %816, %64 : vector<8x128xf32>
    %818 = arith.addf %814, %817 : vector<8x128xf32>
    %c98 = arith.constant 98 : index
    %819 = memref.load %arg4[%c98] : memref<128xf32, #tpu.memory_space<smem>>
    %820 = vector.broadcast %819 : f32 to vector<8x128xf32>
    %821 = arith.mulf %820, %88 : vector<8x128xf32>
    %822 = arith.addf %818, %821 : vector<8x128xf32>
    %c99 = arith.constant 99 : index
    %823 = memref.load %arg4[%c99] : memref<128xf32, #tpu.memory_space<smem>>
    %824 = vector.broadcast %823 : f32 to vector<8x128xf32>
    %825 = arith.mulf %824, %112 : vector<8x128xf32>
    %826 = arith.addf %822, %825 : vector<8x128xf32>
    %c100 = arith.constant 100 : index
    %827 = memref.load %arg4[%c100] : memref<128xf32, #tpu.memory_space<smem>>
    %828 = vector.broadcast %827 : f32 to vector<8x128xf32>
    %829 = arith.mulf %828, %136 : vector<8x128xf32>
    %830 = arith.addf %826, %829 : vector<8x128xf32>
    %c101 = arith.constant 101 : index
    %831 = memref.load %arg4[%c101] : memref<128xf32, #tpu.memory_space<smem>>
    %832 = vector.broadcast %831 : f32 to vector<8x128xf32>
    %833 = arith.mulf %832, %160 : vector<8x128xf32>
    %834 = arith.addf %830, %833 : vector<8x128xf32>
    %c102 = arith.constant 102 : index
    %835 = memref.load %arg4[%c102] : memref<128xf32, #tpu.memory_space<smem>>
    %836 = vector.broadcast %835 : f32 to vector<8x128xf32>
    %837 = arith.mulf %836, %184 : vector<8x128xf32>
    %838 = arith.addf %834, %837 : vector<8x128xf32>
    %c103 = arith.constant 103 : index
    %839 = memref.load %arg4[%c103] : memref<128xf32, #tpu.memory_space<smem>>
    %840 = vector.broadcast %839 : f32 to vector<8x128xf32>
    %841 = arith.mulf %840, %208 : vector<8x128xf32>
    %842 = arith.addf %838, %841 : vector<8x128xf32>
    %c104 = arith.constant 104 : index
    %843 = memref.load %arg4[%c104] : memref<128xf32, #tpu.memory_space<smem>>
    %844 = vector.broadcast %843 : f32 to vector<8x128xf32>
    %845 = arith.mulf %844, %232 : vector<8x128xf32>
    %846 = arith.addf %842, %845 : vector<8x128xf32>
    %c105 = arith.constant 105 : index
    %847 = memref.load %arg4[%c105] : memref<128xf32, #tpu.memory_space<smem>>
    %848 = vector.broadcast %847 : f32 to vector<8x128xf32>
    %849 = arith.mulf %848, %256 : vector<8x128xf32>
    %850 = arith.addf %846, %849 : vector<8x128xf32>
    %c106 = arith.constant 106 : index
    %851 = memref.load %arg4[%c106] : memref<128xf32, #tpu.memory_space<smem>>
    %852 = vector.broadcast %851 : f32 to vector<8x128xf32>
    %853 = arith.mulf %852, %280 : vector<8x128xf32>
    %854 = arith.addf %850, %853 : vector<8x128xf32>
    %c107 = arith.constant 107 : index
    %855 = memref.load %arg4[%c107] : memref<128xf32, #tpu.memory_space<smem>>
    %856 = vector.broadcast %855 : f32 to vector<8x128xf32>
    %857 = arith.mulf %856, %304 : vector<8x128xf32>
    %858 = arith.addf %854, %857 : vector<8x128xf32>
    %c108 = arith.constant 108 : index
    %859 = memref.load %arg4[%c108] : memref<128xf32, #tpu.memory_space<smem>>
    %860 = vector.broadcast %859 : f32 to vector<8x128xf32>
    %861 = arith.mulf %860, %328 : vector<8x128xf32>
    %862 = arith.addf %858, %861 : vector<8x128xf32>
    %c109 = arith.constant 109 : index
    %863 = memref.load %arg4[%c109] : memref<128xf32, #tpu.memory_space<smem>>
    %864 = vector.broadcast %863 : f32 to vector<8x128xf32>
    %865 = arith.mulf %864, %352 : vector<8x128xf32>
    %866 = arith.addf %862, %865 : vector<8x128xf32>
    %c110 = arith.constant 110 : index
    %867 = memref.load %arg4[%c110] : memref<128xf32, #tpu.memory_space<smem>>
    %868 = vector.broadcast %867 : f32 to vector<8x128xf32>
    %869 = arith.mulf %868, %376 : vector<8x128xf32>
    %870 = arith.addf %866, %869 : vector<8x128xf32>
    %c111 = arith.constant 111 : index
    %871 = memref.load %arg4[%c111] : memref<128xf32, #tpu.memory_space<smem>>
    %872 = vector.broadcast %871 : f32 to vector<8x128xf32>
    %873 = arith.mulf %872, %400 : vector<8x128xf32>
    %874 = arith.addf %870, %873 : vector<8x128xf32>
    %cst_134 = arith.constant 0.000000e+00 : f32
    %875 = vector.broadcast %cst_134 : f32 to vector<8x128xf32>
    %876 = arith.maximumf %874, %875 : vector<8x128xf32>
    %c7_135 = arith.constant 7 : index
    %877 = memref.load %arg5[%c7_135] : memref<8xf32, #tpu.memory_space<smem>>
    %c112 = arith.constant 112 : index
    %878 = memref.load %arg4[%c112] : memref<128xf32, #tpu.memory_space<smem>>
    %879 = vector.broadcast %878 : f32 to vector<8x128xf32>
    %880 = arith.mulf %879, %40 : vector<8x128xf32>
    %881 = vector.broadcast %877 : f32 to vector<8x128xf32>
    %882 = arith.addf %881, %880 : vector<8x128xf32>
    %c113 = arith.constant 113 : index
    %883 = memref.load %arg4[%c113] : memref<128xf32, #tpu.memory_space<smem>>
    %884 = vector.broadcast %883 : f32 to vector<8x128xf32>
    %885 = arith.mulf %884, %64 : vector<8x128xf32>
    %886 = arith.addf %882, %885 : vector<8x128xf32>
    %c114 = arith.constant 114 : index
    %887 = memref.load %arg4[%c114] : memref<128xf32, #tpu.memory_space<smem>>
    %888 = vector.broadcast %887 : f32 to vector<8x128xf32>
    %889 = arith.mulf %888, %88 : vector<8x128xf32>
    %890 = arith.addf %886, %889 : vector<8x128xf32>
    %c115 = arith.constant 115 : index
    %891 = memref.load %arg4[%c115] : memref<128xf32, #tpu.memory_space<smem>>
    %892 = vector.broadcast %891 : f32 to vector<8x128xf32>
    %893 = arith.mulf %892, %112 : vector<8x128xf32>
    %894 = arith.addf %890, %893 : vector<8x128xf32>
    %c116 = arith.constant 116 : index
    %895 = memref.load %arg4[%c116] : memref<128xf32, #tpu.memory_space<smem>>
    %896 = vector.broadcast %895 : f32 to vector<8x128xf32>
    %897 = arith.mulf %896, %136 : vector<8x128xf32>
    %898 = arith.addf %894, %897 : vector<8x128xf32>
    %c117 = arith.constant 117 : index
    %899 = memref.load %arg4[%c117] : memref<128xf32, #tpu.memory_space<smem>>
    %900 = vector.broadcast %899 : f32 to vector<8x128xf32>
    %901 = arith.mulf %900, %160 : vector<8x128xf32>
    %902 = arith.addf %898, %901 : vector<8x128xf32>
    %c118 = arith.constant 118 : index
    %903 = memref.load %arg4[%c118] : memref<128xf32, #tpu.memory_space<smem>>
    %904 = vector.broadcast %903 : f32 to vector<8x128xf32>
    %905 = arith.mulf %904, %184 : vector<8x128xf32>
    %906 = arith.addf %902, %905 : vector<8x128xf32>
    %c119 = arith.constant 119 : index
    %907 = memref.load %arg4[%c119] : memref<128xf32, #tpu.memory_space<smem>>
    %908 = vector.broadcast %907 : f32 to vector<8x128xf32>
    %909 = arith.mulf %908, %208 : vector<8x128xf32>
    %910 = arith.addf %906, %909 : vector<8x128xf32>
    %c120 = arith.constant 120 : index
    %911 = memref.load %arg4[%c120] : memref<128xf32, #tpu.memory_space<smem>>
    %912 = vector.broadcast %911 : f32 to vector<8x128xf32>
    %913 = arith.mulf %912, %232 : vector<8x128xf32>
    %914 = arith.addf %910, %913 : vector<8x128xf32>
    %c121 = arith.constant 121 : index
    %915 = memref.load %arg4[%c121] : memref<128xf32, #tpu.memory_space<smem>>
    %916 = vector.broadcast %915 : f32 to vector<8x128xf32>
    %917 = arith.mulf %916, %256 : vector<8x128xf32>
    %918 = arith.addf %914, %917 : vector<8x128xf32>
    %c122 = arith.constant 122 : index
    %919 = memref.load %arg4[%c122] : memref<128xf32, #tpu.memory_space<smem>>
    %920 = vector.broadcast %919 : f32 to vector<8x128xf32>
    %921 = arith.mulf %920, %280 : vector<8x128xf32>
    %922 = arith.addf %918, %921 : vector<8x128xf32>
    %c123 = arith.constant 123 : index
    %923 = memref.load %arg4[%c123] : memref<128xf32, #tpu.memory_space<smem>>
    %924 = vector.broadcast %923 : f32 to vector<8x128xf32>
    %925 = arith.mulf %924, %304 : vector<8x128xf32>
    %926 = arith.addf %922, %925 : vector<8x128xf32>
    %c124 = arith.constant 124 : index
    %927 = memref.load %arg4[%c124] : memref<128xf32, #tpu.memory_space<smem>>
    %928 = vector.broadcast %927 : f32 to vector<8x128xf32>
    %929 = arith.mulf %928, %328 : vector<8x128xf32>
    %930 = arith.addf %926, %929 : vector<8x128xf32>
    %c125 = arith.constant 125 : index
    %931 = memref.load %arg4[%c125] : memref<128xf32, #tpu.memory_space<smem>>
    %932 = vector.broadcast %931 : f32 to vector<8x128xf32>
    %933 = arith.mulf %932, %352 : vector<8x128xf32>
    %934 = arith.addf %930, %933 : vector<8x128xf32>
    %c126 = arith.constant 126 : index
    %935 = memref.load %arg4[%c126] : memref<128xf32, #tpu.memory_space<smem>>
    %936 = vector.broadcast %935 : f32 to vector<8x128xf32>
    %937 = arith.mulf %936, %376 : vector<8x128xf32>
    %938 = arith.addf %934, %937 : vector<8x128xf32>
    %c127 = arith.constant 127 : index
    %939 = memref.load %arg4[%c127] : memref<128xf32, #tpu.memory_space<smem>>
    %940 = vector.broadcast %939 : f32 to vector<8x128xf32>
    %941 = arith.mulf %940, %400 : vector<8x128xf32>
    %942 = arith.addf %938, %941 : vector<8x128xf32>
    %cst_136 = arith.constant 0.000000e+00 : f32
    %943 = vector.broadcast %cst_136 : f32 to vector<8x128xf32>
    %944 = arith.maximumf %942, %943 : vector<8x128xf32>
    %c0_137 = arith.constant 0 : index
    %945 = memref.load %arg7[%c0_137] : memref<1xf32, #tpu.memory_space<smem>>
    %c0_138 = arith.constant 0 : index
    %946 = memref.load %arg6[%c0_138] : memref<8xf32, #tpu.memory_space<smem>>
    %947 = vector.broadcast %946 : f32 to vector<8x128xf32>
    %948 = arith.mulf %947, %468 : vector<8x128xf32>
    %949 = vector.broadcast %945 : f32 to vector<8x128xf32>
    %950 = arith.addf %949, %948 : vector<8x128xf32>
    %c1_139 = arith.constant 1 : index
    %951 = memref.load %arg6[%c1_139] : memref<8xf32, #tpu.memory_space<smem>>
    %952 = vector.broadcast %951 : f32 to vector<8x128xf32>
    %953 = arith.mulf %952, %536 : vector<8x128xf32>
    %954 = arith.addf %950, %953 : vector<8x128xf32>
    %c2_140 = arith.constant 2 : index
    %955 = memref.load %arg6[%c2_140] : memref<8xf32, #tpu.memory_space<smem>>
    %956 = vector.broadcast %955 : f32 to vector<8x128xf32>
    %957 = arith.mulf %956, %604 : vector<8x128xf32>
    %958 = arith.addf %954, %957 : vector<8x128xf32>
    %c3_141 = arith.constant 3 : index
    %959 = memref.load %arg6[%c3_141] : memref<8xf32, #tpu.memory_space<smem>>
    %960 = vector.broadcast %959 : f32 to vector<8x128xf32>
    %961 = arith.mulf %960, %672 : vector<8x128xf32>
    %962 = arith.addf %958, %961 : vector<8x128xf32>
    %c4_142 = arith.constant 4 : index
    %963 = memref.load %arg6[%c4_142] : memref<8xf32, #tpu.memory_space<smem>>
    %964 = vector.broadcast %963 : f32 to vector<8x128xf32>
    %965 = arith.mulf %964, %740 : vector<8x128xf32>
    %966 = arith.addf %962, %965 : vector<8x128xf32>
    %c5_143 = arith.constant 5 : index
    %967 = memref.load %arg6[%c5_143] : memref<8xf32, #tpu.memory_space<smem>>
    %968 = vector.broadcast %967 : f32 to vector<8x128xf32>
    %969 = arith.mulf %968, %808 : vector<8x128xf32>
    %970 = arith.addf %966, %969 : vector<8x128xf32>
    %c6_144 = arith.constant 6 : index
    %971 = memref.load %arg6[%c6_144] : memref<8xf32, #tpu.memory_space<smem>>
    %972 = vector.broadcast %971 : f32 to vector<8x128xf32>
    %973 = arith.mulf %972, %876 : vector<8x128xf32>
    %974 = arith.addf %970, %973 : vector<8x128xf32>
    %c7_145 = arith.constant 7 : index
    %975 = memref.load %arg6[%c7_145] : memref<8xf32, #tpu.memory_space<smem>>
    %976 = vector.broadcast %975 : f32 to vector<8x128xf32>
    %977 = arith.mulf %976, %944 : vector<8x128xf32>
    %978 = arith.addf %974, %977 : vector<8x128xf32>
    %979 = arith.negf %978 : vector<8x128xf32>
    %980 = math.exp %979 : vector<8x128xf32>
    %cst_146 = arith.constant 1.000000e+00 : f32
    %981 = vector.broadcast %cst_146 : f32 to vector<8x128xf32>
    %982 = arith.addf %981, %980 : vector<8x128xf32>
    %983 = arith.divf %981, %982 : vector<8x128xf32>
    %984 = arith.index_cast %1 : i32 to index
    %c0_147 = arith.constant 0 : index
    %985 = vector.load %arg8[%984, %c0_147] : memref<8x128xf32, #tpu.memory_space<vmem>>, vector<8x128xf32>
    tpu.vector_store %arg8[%984, %c0_147], %983 {strides = array<i32>} : memref<8x128xf32, #tpu.memory_space<vmem>>, vector<8x128xf32>,
    %c1_i32 = arith.constant 1 : i32
    return
  }
  func.func @transform_0(%arg0: i32) -> (i32, i32, i32) {
    %c0_i32 = arith.constant 0 : i32
    %c0_i32_0 = arith.constant 0 : i32
    %c0_i32_1 = arith.constant 0 : i32
    return %c0_i32, %arg0, %c0_i32_0 : i32, i32, i32
  }
  func.func @transform_1(%arg0: i32) -> i32 {
    %c0_i32 = arith.constant 0 : i32
    %c0_i32_0 = arith.constant 0 : i32
    return %c0_i32 : i32
  }
  func.func @transform_2(%arg0: i32) -> i32 {
    %c0_i32 = arith.constant 0 : i32
    %c0_i32_0 = arith.constant 0 : i32
    return %c0_i32 : i32
  }
  func.func @transform_3(%arg0: i32) -> i32 {
    %c0_i32 = arith.constant 0 : i32
    %c0_i32_0 = arith.constant 0 : i32
    return %c0_i32 : i32
  }
  func.func @transform_4(%arg0: i32) -> i32 {
    %c0_i32 = arith.constant 0 : i32
    %c0_i32_0 = arith.constant 0 : i32
    return %c0_i32 : i32
  }
  func.func @transform_5(%arg0: i32) -> i32 {
    %c0_i32 = arith.constant 0 : i32
    %c0_i32_0 = arith.constant 0 : i32
    return %c0_i32 : i32
  }
  func.func @transform_6(%arg0: i32) -> i32 {
    %c0_i32 = arith.constant 0 : i32
    %c0_i32_0 = arith.constant 0 : i32
    return %c0_i32 : i32
  }
  func.func @transform_7(%arg0: i32) -> (i32, i32) {
    %c0_i32 = arith.constant 0 : i32
    %c0_i32_0 = arith.constant 0 : i32
    return %arg0, %c0_i32 : i32, i32
  }
}

</mosaic_0001>

<llo_original>
// kernel: data_validation_nn_t.1
$region0: #{data_validation_nn_t.1}
  #allocation0 [shape = 'u32[]', space=smem, size = 0x4, offset = 0x4, fixed_abs, tag = 'smem constant byte address 0x4 - core index']
  #allocation1 [shape = 'u32[144,128]{1,0:T(1,128)}', space=vmem, size = 0x12000, scoped, tag = 'internal scratch']
  #allocation2 [shape = 'f32[1]{0:T(128)S(6)}', space=smem, size = 0x200, scoped, tag = 'scoped memory for data_validation_nn_t.1']
  %s0 = inlined_call_operand.vmem [shape: f32[5,8,128], index: 0, kind: input, shape index: {}]
  %s1 = inlined_call_operand.vmem [shape: f32[80], index: 1, kind: input, shape index: {}]
  %s2 = inlined_call_operand.vmem [shape: f32[16], index: 2, kind: input, shape index: {}]
  %s3 = inlined_call_operand.vmem [shape: f32[128], index: 3, kind: input, shape index: {}]
  %s4 = inlined_call_operand.vmem [shape: f32[8], index: 4, kind: input, shape index: {}]
  %s5 = inlined_call_operand.vmem [shape: f32[8], index: 5, kind: input, shape index: {}]
  %s6 = inlined_call_operand.<no memory space> [shape: f32[1], index: 6, kind: input, shape index: {}]
  %s7 = inlined_call_operand.vmem [shape: f32[8,128], index: 7, kind: output, shape index: {}]
  %s8 = sld [smem:[#allocation0]]
  $region58: #{data_validation_nn_t.1} parent=0
    _
  %s10 = ssub.s32 1, %s8
  %s11 = scalar_select 0, %s10, %s8
  %12 = sst [smem:[#allocation2]] %s6
  $region1: #{data_validation_nn_t.1} parent=0
    #allocation3 [shape = 'u8[512]{0}', space=smem, size = 0x200, scoped, tag = 'input window, operand 1, single buffered']
    #allocation4 [shape = 's32[1]{0}', space=sflag, size = 0x4, scoped, tag = 'scoped memory for data_validation_nn_t.1']
    #allocation5 [shape = 'u8[512]{0}', space=smem, size = 0x200, scoped, tag = 'input window, operand 2, single buffered']
    #allocation6 [shape = 's32[1]{0}', space=sflag, size = 0x4, scoped, tag = 'scoped memory for data_validation_nn_t.1']
    #allocation7 [shape = 'u8[512]{0}', space=smem, size = 0x200, scoped, tag = 'input window, operand 3, single buffered']
    #allocation8 [shape = 'u8[512]{0}', space=smem, size = 0x200, scoped, tag = 'input window, operand 4, single buffered']
    #allocation9 [shape = 's32[1]{0}', space=sflag, size = 0x4, scoped, tag = 'scoped memory for data_validation_nn_t.1']
    #allocation10 [shape = 'u8[512]{0}', space=smem, size = 0x200, scoped, tag = 'input window, operand 5, single buffered']
    %13 = vsyncpa [#allocation4], 0
    %14 = vsyncpa [#allocation6], 0
    %15 = vsyncpa [#allocation9], 0
    // Predicated region
    $region2: #{data_validation_nn_t.1} parent=1 // pred_check
      _
    $region3: #{data_validation_nn_t.1} parent=1 // pred_check_branch
      %17 = sbr.rel (0) target = $region5
    $region4: #{data_validation_nn_t.1} parent=1 // pred_region
      _
    $region5: #{data_validation_nn_t.1} parent=1 // pred_fallthru
      _
    // Predicated region
    $region6: #{data_validation_nn_t.1} parent=1 // pred_check
      _
    $region7: #{data_validation_nn_t.1} parent=1 // pred_check_branch
      %19 = sbr.rel (0) target = $region9
    $region8: #{data_validation_nn_t.1} parent=1 // pred_region
      %s21 = ssub.s32 16, 16
      %22 = vsyncadd [#allocation4], %s21
      %s24 = sshll.u32 %s1, 4
      %s25 = int_to_ptr.vmem [resolvable:$true] %s24
      %27 = dma.vmem_to_smem %s25, 16, [#allocation3], [#allocation4]
    $region9: #{data_validation_nn_t.1} parent=1 // pred_fallthru
      _
    // Predicated region
    $region10: #{data_validation_nn_t.1} parent=1 // pred_check
      _
    $region11: #{data_validation_nn_t.1} parent=1 // pred_check_branch
      %29 = sbr.rel (0) target = $region13
    $region12: #{data_validation_nn_t.1} parent=1 // pred_region
      %s31 = ssub.s32 16, 16
      %32 = vsyncadd [#allocation6], %s31
      %s34 = sshll.u32 %s2, 4
      %s35 = int_to_ptr.vmem [resolvable:$true] %s34
      %37 = dma.vmem_to_smem %s35, 16, [#allocation5], [#allocation6]
    $region13: #{data_validation_nn_t.1} parent=1 // pred_fallthru
      _
    // Predicated region
    $region14: #{data_validation_nn_t.1} parent=1 // pred_check
      _
    $region15: #{data_validation_nn_t.1} parent=1 // pred_check_branch
      %39 = sbr.rel (0) target = $region17
    $region16: #{data_validation_nn_t.1} parent=1 // pred_region
      %s41 = ssub.s32 16, 16
      %42 = vsyncadd [#allocation6], %s41
      %s44 = sshll.u32 %s3, 4
      %s45 = int_to_ptr.vmem [resolvable:$true] %s44
      %47 = dma.vmem_to_smem %s45, 16, [#allocation7], [#allocation6]
    $region17: #{data_validation_nn_t.1} parent=1 // pred_fallthru
      _
    // Predicated region
    $region18: #{data_validation_nn_t.1} parent=1 // pred_check
      _
    $region19: #{data_validation_nn_t.1} parent=1 // pred_check_branch
      %49 = sbr.rel (0) target = $region21
    $region20: #{data_validation_nn_t.1} parent=1 // pred_region
      %s51 = ssub.s32 16, 16
      %52 = vsyncadd [#allocation9], %s51
      %s54 = sshll.u32 %s4, 4
      %s55 = int_to_ptr.vmem [resolvable:$true] %s54
      %57 = dma.vmem_to_smem %s55, 16, [#allocation8], [#allocation9]
    $region21: #{data_validation_nn_t.1} parent=1 // pred_fallthru
      _
    // Predicated region
    $region22: #{data_validation_nn_t.1} parent=1 // pred_check
      _
    $region23: #{data_validation_nn_t.1} parent=1 // pred_check_branch
      %59 = sbr.rel (0) target = $region25
    $region24: #{data_validation_nn_t.1} parent=1 // pred_region
      %s61 = ssub.s32 16, 16
      %62 = vsyncadd [#allocation9], %s61
      %s64 = sshll.u32 %s5, 4
      %s65 = int_to_ptr.vmem [resolvable:$true] %s64
      %67 = dma.vmem_to_smem %s65, 16, [#allocation10], [#allocation9]
    $region25: #{data_validation_nn_t.1} parent=1 // pred_fallthru
      _
    // Predicated region
    $region26: #{data_validation_nn_t.1} parent=1 // pred_check
      _
    $region27: #{data_validation_nn_t.1} parent=1 // pred_check_branch
      %69 = sbr.rel (0) target = $region29
    $region28: #{data_validation_nn_t.1} parent=1 // pred_region
      _
    $region29: #{data_validation_nn_t.1} parent=1 // pred_fallthru
      _
    // Predicated region
    $region30: #{data_validation_nn_t.1} parent=1 // pred_check
      _
    $region31: #{data_validation_nn_t.1} parent=1 // pred_check_branch
      %71 = sbr.rel (0) target = $region33
    $region32: #{data_validation_nn_t.1} parent=1 // pred_region
      %72 = dma.done [#allocation4], 16
    $region33: #{data_validation_nn_t.1} parent=1 // pred_fallthru
      _
    // Predicated region
    $region34: #{data_validation_nn_t.1} parent=1 // pred_check
      _
    $region35: #{data_validation_nn_t.1} parent=1 // pred_check_branch
      %74 = sbr.rel (0) target = $region37
    $region36: #{data_validation_nn_t.1} parent=1 // pred_region
      %75 = dma.done [#allocation6], 16
    $region37: #{data_validation_nn_t.1} parent=1 // pred_fallthru
      _
    // Predicated region
    $region38: #{data_validation_nn_t.1} parent=1 // pred_check
      _
    $region39: #{data_validation_nn_t.1} parent=1 // pred_check_branch
      %77 = sbr.rel (0) target = $region41
    $region40: #{data_validation_nn_t.1} parent=1 // pred_region
      %78 = dma.done [#allocation6], 16
    $region41: #{data_validation_nn_t.1} parent=1 // pred_fallthru
      _
    // Predicated region
    $region42: #{data_validation_nn_t.1} parent=1 // pred_check
      _
    $region43: #{data_validation_nn_t.1} parent=1 // pred_check_branch
      %80 = sbr.rel (0) target = $region45
    $region44: #{data_validation_nn_t.1} parent=1 // pred_region
      %81 = dma.done [#allocation9], 16
    $region45: #{data_validation_nn_t.1} parent=1 // pred_fallthru
      _
    // Predicated region
    $region46: #{data_validation_nn_t.1} parent=1 // pred_check
      _
    $region47: #{data_validation_nn_t.1} parent=1 // pred_check_branch
      %83 = sbr.rel (0) target = $region49
    $region48: #{data_validation_nn_t.1} parent=1 // pred_region
      %84 = dma.done [#allocation9], 16
    $region49: #{data_validation_nn_t.1} parent=1 // pred_fallthru
      _
    %85 = sfence
    %v86 = vld [vmem:[%s0] sm:$0xff]
    %s87 = sadd.s32 0, 8
    %s88 = scalar_lea.vmem %s0, %s87
    %v89 = vld [vmem:[%s88] sm:$0xff]
    %s90 = sadd.s32 0, 16
    %s91 = scalar_lea.vmem %s0, %s90
    %v92 = vld [vmem:[%s91] sm:$0xff]
    %s93 = sadd.s32 0, 24
    %s94 = scalar_lea.vmem %s0, %s93
    %v95 = vld [vmem:[%s94] sm:$0xff]
    %s96 = sadd.s32 0, 32
    %s97 = scalar_lea.vmem %s0, %s96
    %v98 = vld [vmem:[%s97] sm:$0xff]
    %s99 = sld [smem:[#allocation5]]
    %s100 = sld [smem:[#allocation3]]
    %v101 = vstv %s100
    %v102 = vmul.f32 %v101, %v86
    %v103 = vstv %s99
    %v104 = vadd.f32 %v103, %v102
    %s105 = sld [smem:[#allocation3 + $0x1]]
    %v106 = vstv %s105
    %v107 = vmul.f32 %v106, %v89
    %v108 = vadd.f32 %v104, %v107
    %s109 = sld [smem:[#allocation3 + $0x2]]
    %v110 = vstv %s109
    %v111 = vmul.f32 %v110, %v92
    %v112 = vadd.f32 %v108, %v111
    %s113 = sld [smem:[#allocation3 + $0x3]]
    %v114 = vstv %s113
    %v115 = vmul.f32 %v114, %v95
    %v116 = vadd.f32 %v112, %v115
    %s117 = sld [smem:[#allocation3 + $0x4]]
    %v118 = vstv %s117
    %v119 = vmul.f32 %v118, %v98
    %v120 = vadd.f32 %v116, %v119
    %v121 = vmax.f32 %v120, 0.0
    %s122 = sld [smem:[#allocation5 + $0x1]]
    %s123 = sld [smem:[#allocation3 + $0x5]]
    %v124 = vstv %s123
    %v125 = vmul.f32 %v124, %v86
    %v126 = vstv %s122
    %v127 = vadd.f32 %v126, %v125
    %s128 = sld [smem:[#allocation3 + $0x6]]
    %v129 = vstv %s128
    %v130 = vmul.f32 %v129, %v89
    %v131 = vadd.f32 %v127, %v130
    %s132 = sld [smem:[#allocation3 + $0x7]]
    %v133 = vstv %s132
    %v134 = vmul.f32 %v133, %v92
    %v135 = vadd.f32 %v131, %v134
    %s136 = sld [smem:[#allocation3 + $0x8]]
    %v137 = vstv %s136
    %v138 = vmul.f32 %v137, %v95
    %v139 = vadd.f32 %v135, %v138
    %s140 = sld [smem:[#allocation3 + $0x9]]
    %v141 = vstv %s140
    %v142 = vmul.f32 %v141, %v98
    %v143 = vadd.f32 %v139, %v142
    %v144 = vmax.f32 %v143, 0.0
    %s145 = sld [smem:[#allocation5 + $0x2]]
    %s146 = sld [smem:[#allocation3 + $0xa]]
    %v147 = vstv %s146
    %v148 = vmul.f32 %v147, %v86
    %v149 = vstv %s145
    %v150 = vadd.f32 %v149, %v148
    %s151 = sld [smem:[#allocation3 + $0xb]]
    %v152 = vstv %s151
    %v153 = vmul.f32 %v152, %v89
    %v154 = vadd.f32 %v150, %v153
    %s155 = sld [smem:[#allocation3 + $0xc]]
    %v156 = vstv %s155
    %v157 = vmul.f32 %v156, %v92
    %v158 = vadd.f32 %v154, %v157
    %s159 = sld [smem:[#allocation3 + $0xd]]
    %v160 = vstv %s159
    %v161 = vmul.f32 %v160, %v95
    %v162 = vadd.f32 %v158, %v161
    %s163 = sld [smem:[#allocation3 + $0xe]]
    %v164 = vstv %s163
    %v165 = vmul.f32 %v164, %v98
    %v166 = vadd.f32 %v162, %v165
    %v167 = vmax.f32 %v166, 0.0
    %s168 = sld [smem:[#allocation5 + $0x3]]
    %s169 = sld [smem:[#allocation3 + $0xf]]
    %v170 = vstv %s169
    %v171 = vmul.f32 %v170, %v86
    %v172 = vstv %s168
    %v173 = vadd.f32 %v172, %v171
    %s174 = sld [smem:[#allocation3 + $0x10]]
    %v175 = vstv %s174
    %v176 = vmul.f32 %v175, %v89
    %v177 = vadd.f32 %v173, %v176
    %s178 = sld [smem:[#allocation3 + $0x11]]
    %v179 = vstv %s178
    %v180 = vmul.f32 %v179, %v92
    %v181 = vadd.f32 %v177, %v180
    %s182 = sld [smem:[#allocation3 + $0x12]]
    %v183 = vstv %s182
    %v184 = vmul.f32 %v183, %v95
    %v185 = vadd.f32 %v181, %v184
    %s186 = sld [smem:[#allocation3 + $0x13]]
    %v187 = vstv %s186
    %v188 = vmul.f32 %v187, %v98
    %v189 = vadd.f32 %v185, %v188
    %v190 = vmax.f32 %v189, 0.0
    %s191 = sld [smem:[#allocation5 + $0x4]]
    %s192 = sld [smem:[#allocation3 + $0x14]]
    %v193 = vstv %s192
    %v194 = vmul.f32 %v193, %v86
    %v195 = vstv %s191
    %v196 = vadd.f32 %v195, %v194
    %s197 = sld [smem:[#allocation3 + $0x15]]
    %v198 = vstv %s197
    %v199 = vmul.f32 %v198, %v89
    %v200 = vadd.f32 %v196, %v199
    %s201 = sld [smem:[#allocation3 + $0x16]]
    %v202 = vstv %s201
    %v203 = vmul.f32 %v202, %v92
    %v204 = vadd.f32 %v200, %v203
    %s205 = sld [smem:[#allocation3 + $0x17]]
    %v206 = vstv %s205
    %v207 = vmul.f32 %v206, %v95
    %v208 = vadd.f32 %v204, %v207
    %s209 = sld [smem:[#allocation3 + $0x18]]
    %v210 = vstv %s209
    %v211 = vmul.f32 %v210, %v98
    %v212 = vadd.f32 %v208, %v211
    %v213 = vmax.f32 %v212, 0.0
    %s214 = sld [smem:[#allocation5 + $0x5]]
    %s215 = sld [smem:[#allocation3 + $0x19]]
    %v216 = vstv %s215
    %v217 = vmul.f32 %v216, %v86
    %v218 = vstv %s214
    %v219 = vadd.f32 %v218, %v217
    %s220 = sld [smem:[#allocation3 + $0x1a]]
    %v221 = vstv %s220
    %v222 = vmul.f32 %v221, %v89
    %v223 = vadd.f32 %v219, %v222
    %s224 = sld [smem:[#allocation3 + $0x1b]]
    %v225 = vstv %s224
    %v226 = vmul.f32 %v225, %v92
    %v227 = vadd.f32 %v223, %v226
    %s228 = sld [smem:[#allocation3 + $0x1c]]
    %v229 = vstv %s228
    %v230 = vmul.f32 %v229, %v95
    %v231 = vadd.f32 %v227, %v230
    %s232 = sld [smem:[#allocation3 + $0x1d]]
    %v233 = vstv %s232
    %v234 = vmul.f32 %v233, %v98
    %v235 = vadd.f32 %v231, %v234
    %v236 = vmax.f32 %v235, 0.0
    %s237 = sld [smem:[#allocation5 + $0x6]]
    %s238 = sld [smem:[#allocation3 + $0x1e]]
    %v239 = vstv %s238
    %v240 = vmul.f32 %v239, %v86
    %v241 = vstv %s237
    %v242 = vadd.f32 %v241, %v240
    %s243 = sld [smem:[#allocation3 + $0x1f]]
    %v244 = vstv %s243
    %v245 = vmul.f32 %v244, %v89
    %v246 = vadd.f32 %v242, %v245
    %s247 = sld [smem:[#allocation3 + $0x20]]
    %v248 = vstv %s247
    %v249 = vmul.f32 %v248, %v92
    %v250 = vadd.f32 %v246, %v249
    %s251 = sld [smem:[#allocation3 + $0x21]]
    %v252 = vstv %s251
    %v253 = vmul.f32 %v252, %v95
    %v254 = vadd.f32 %v250, %v253
    %s255 = sld [smem:[#allocation3 + $0x22]]
    %v256 = vstv %s255
    %v257 = vmul.f32 %v256, %v98
    %v258 = vadd.f32 %v254, %v257
    %v259 = vmax.f32 %v258, 0.0
    %s260 = sld [smem:[#allocation5 + $0x7]]
    %s261 = sld [smem:[#allocation3 + $0x23]]
    %v262 = vstv %s261
    %v263 = vmul.f32 %v262, %v86
    %v264 = vstv %s260
    %v265 = vadd.f32 %v264, %v263
    %s266 = sld [smem:[#allocation3 + $0x24]]
    %v267 = vstv %s266
    %v268 = vmul.f32 %v267, %v89
    %v269 = vadd.f32 %v265, %v268
    %s270 = sld [smem:[#allocation3 + $0x25]]
    %v271 = vstv %s270
    %v272 = vmul.f32 %v271, %v92
    %v273 = vadd.f32 %v269, %v272
    %s274 = sld [smem:[#allocation3 + $0x26]]
    %v275 = vstv %s274
    %v276 = vmul.f32 %v275, %v95
    %v277 = vadd.f32 %v273, %v276
    %s278 = sld [smem:[#allocation3 + $0x27]]
    %v279 = vstv %s278
    %v280 = vmul.f32 %v279, %v98
    %v281 = vadd.f32 %v277, %v280
    %v282 = vmax.f32 %v281, 0.0
    %s283 = sld [smem:[#allocation5 + $0x8]]
    %s284 = sld [smem:[#allocation3 + $0x28]]
    %v285 = vstv %s284
    %v286 = vmul.f32 %v285, %v86
    %v287 = vstv %s283
    %v288 = vadd.f32 %v287, %v286
    %s289 = sld [smem:[#allocation3 + $0x29]]
    %v290 = vstv %s289
    %v291 = vmul.f32 %v290, %v89
    %v292 = vadd.f32 %v288, %v291
    %s293 = sld [smem:[#allocation3 + $0x2a]]
    %v294 = vstv %s293
    %v295 = vmul.f32 %v294, %v92
    %v296 = vadd.f32 %v292, %v295
    %s297 = sld [smem:[#allocation3 + $0x2b]]
    %v298 = vstv %s297
    %v299 = vmul.f32 %v298, %v95
    %v300 = vadd.f32 %v296, %v299
    %s301 = sld [smem:[#allocation3 + $0x2c]]
    %v302 = vstv %s301
    %v303 = vmul.f32 %v302, %v98
    %v304 = vadd.f32 %v300, %v303
    %v305 = vmax.f32 %v304, 0.0
    %s306 = sld [smem:[#allocation5 + $0x9]]
    %s307 = sld [smem:[#allocation3 + $0x2d]]
    %v308 = vstv %s307
    %v309 = vmul.f32 %v308, %v86
    %v310 = vstv %s306
    %v311 = vadd.f32 %v310, %v309
    %s312 = sld [smem:[#allocation3 + $0x2e]]
    %v313 = vstv %s312
    %v314 = vmul.f32 %v313, %v89
    %v315 = vadd.f32 %v311, %v314
    %s316 = sld [smem:[#allocation3 + $0x2f]]
    %v317 = vstv %s316
    %v318 = vmul.f32 %v317, %v92
    %v319 = vadd.f32 %v315, %v318
    %s320 = sld [smem:[#allocation3 + $0x30]]
    %v321 = vstv %s320
    %v322 = vmul.f32 %v321, %v95
    %v323 = vadd.f32 %v319, %v322
    %s324 = sld [smem:[#allocation3 + $0x31]]
    %v325 = vstv %s324
    %v326 = vmul.f32 %v325, %v98
    %v327 = vadd.f32 %v323, %v326
    %v328 = vmax.f32 %v327, 0.0
    %s329 = sld [smem:[#allocation5 + $0xa]]
    %s330 = sld [smem:[#allocation3 + $0x32]]
    %v331 = vstv %s330
    %v332 = vmul.f32 %v331, %v86
    %v333 = vstv %s329
    %v334 = vadd.f32 %v333, %v332
    %s335 = sld [smem:[#allocation3 + $0x33]]
    %v336 = vstv %s335
    %v337 = vmul.f32 %v336, %v89
    %v338 = vadd.f32 %v334, %v337
    %s339 = sld [smem:[#allocation3 + $0x34]]
    %v340 = vstv %s339
    %v341 = vmul.f32 %v340, %v92
    %v342 = vadd.f32 %v338, %v341
    %s343 = sld [smem:[#allocation3 + $0x35]]
    %v344 = vstv %s343
    %v345 = vmul.f32 %v344, %v95
    %v346 = vadd.f32 %v342, %v345
    %s347 = sld [smem:[#allocation3 + $0x36]]
    %v348 = vstv %s347
    %v349 = vmul.f32 %v348, %v98
    %v350 = vadd.f32 %v346, %v349
    %v351 = vmax.f32 %v350, 0.0
    %s352 = sld [smem:[#allocation5 + $0xb]]
    %s353 = sld [smem:[#allocation3 + $0x37]]
    %v354 = vstv %s353
    %v355 = vmul.f32 %v354, %v86
    %v356 = vstv %s352
    %v357 = vadd.f32 %v356, %v355
    %s358 = sld [smem:[#allocation3 + $0x38]]
    %v359 = vstv %s358
    %v360 = vmul.f32 %v359, %v89
    %v361 = vadd.f32 %v357, %v360
    %s362 = sld [smem:[#allocation3 + $0x39]]
    %v363 = vstv %s362
    %v364 = vmul.f32 %v363, %v92
    %v365 = vadd.f32 %v361, %v364
    %s366 = sld [smem:[#allocation3 + $0x3a]]
    %v367 = vstv %s366
    %v368 = vmul.f32 %v367, %v95
    %v369 = vadd.f32 %v365, %v368
    %s370 = sld [smem:[#allocation3 + $0x3b]]
    %v371 = vstv %s370
    %v372 = vmul.f32 %v371, %v98
    %v373 = vadd.f32 %v369, %v372
    %v374 = vmax.f32 %v373, 0.0
    %s375 = sld [smem:[#allocation5 + $0xc]]
    %s376 = sld [smem:[#allocation3 + $0x3c]]
    %v377 = vstv %s376
    %v378 = vmul.f32 %v377, %v86
    %v379 = vstv %s375
    %v380 = vadd.f32 %v379, %v378
    %s381 = sld [smem:[#allocation3 + $0x3d]]
    %v382 = vstv %s381
    %v383 = vmul.f32 %v382, %v89
    %v384 = vadd.f32 %v380, %v383
    %s385 = sld [smem:[#allocation3 + $0x3e]]
    %v386 = vstv %s385
    %v387 = vmul.f32 %v386, %v92
    %v388 = vadd.f32 %v384, %v387
    %s389 = sld [smem:[#allocation3 + $0x3f]]
    %v390 = vstv %s389
    %v391 = vmul.f32 %v390, %v95
    %v392 = vadd.f32 %v388, %v391
    %s393 = sld [smem:[#allocation3 + $0x40]]
    %v394 = vstv %s393
    %v395 = vmul.f32 %v394, %v98
    %v396 = vadd.f32 %v392, %v395
    %v397 = vmax.f32 %v396, 0.0
    %s398 = sld [smem:[#allocation5 + $0xd]]
    %s399 = sld [smem:[#allocation3 + $0x41]]
    %v400 = vstv %s399
    %v401 = vmul.f32 %v400, %v86
    %v402 = vstv %s398
    %v403 = vadd.f32 %v402, %v401
    %s404 = sld [smem:[#allocation3 + $0x42]]
    %v405 = vstv %s404
    %v406 = vmul.f32 %v405, %v89
    %v407 = vadd.f32 %v403, %v406
    %s408 = sld [smem:[#allocation3 + $0x43]]
    %v409 = vstv %s408
    %v410 = vmul.f32 %v409, %v92
    %v411 = vadd.f32 %v407, %v410
    %s412 = sld [smem:[#allocation3 + $0x44]]
    %v413 = vstv %s412
    %v414 = vmul.f32 %v413, %v95
    %v415 = vadd.f32 %v411, %v414
    %s416 = sld [smem:[#allocation3 + $0x45]]
    %v417 = vstv %s416
    %v418 = vmul.f32 %v417, %v98
    %v419 = vadd.f32 %v415, %v418
    %v420 = vmax.f32 %v419, 0.0
    %s421 = sld [smem:[#allocation5 + $0xe]]
    %s422 = sld [smem:[#allocation3 + $0x46]]
    %v423 = vstv %s422
    %v424 = vmul.f32 %v423, %v86
    %v425 = vstv %s421
    %v426 = vadd.f32 %v425, %v424
    %s427 = sld [smem:[#allocation3 + $0x47]]
    %v428 = vstv %s427
    %v429 = vmul.f32 %v428, %v89
    %v430 = vadd.f32 %v426, %v429
    %s431 = sld [smem:[#allocation3 + $0x48]]
    %v432 = vstv %s431
    %v433 = vmul.f32 %v432, %v92
    %v434 = vadd.f32 %v430, %v433
    %s435 = sld [smem:[#allocation3 + $0x49]]
    %v436 = vstv %s435
    %v437 = vmul.f32 %v436, %v95
    %v438 = vadd.f32 %v434, %v437
    %s439 = sld [smem:[#allocation3 + $0x4a]]
    %v440 = vstv %s439
    %v441 = vmul.f32 %v440, %v98
    %v442 = vadd.f32 %v438, %v441
    %v443 = vmax.f32 %v442, 0.0
    %s444 = sld [smem:[#allocation5 + $0xf]]
    %s445 = sld [smem:[#allocation3 + $0x4b]]
    %v446 = vstv %s445
    %v447 = vmul.f32 %v446, %v86
    %v448 = vstv %s444
    %v449 = vadd.f32 %v448, %v447
    %s450 = sld [smem:[#allocation3 + $0x4c]]
    %v451 = vstv %s450
    %v452 = vmul.f32 %v451, %v89
    %v453 = vadd.f32 %v449, %v452
    %s454 = sld [smem:[#allocation3 + $0x4d]]
    %v455 = vstv %s454
    %v456 = vmul.f32 %v455, %v92
    %v457 = vadd.f32 %v453, %v456
    %s458 = sld [smem:[#allocation3 + $0x4e]]
    %v459 = vstv %s458
    %v460 = vmul.f32 %v459, %v95
    %v461 = vadd.f32 %v457, %v460
    %s462 = sld [smem:[#allocation3 + $0x4f]]
    %v463 = vstv %s462
    %v464 = vmul.f32 %v463, %v98
    %v465 = vadd.f32 %v461, %v464
    %v466 = vmax.f32 %v465, 0.0
    %s467 = sld [smem:[#allocation8]]
    %s468 = sld [smem:[#allocation7]]
    %v469 = vstv %s468
    %v470 = vmul.f32 %v469, %v121
    %v471 = vstv %s467
    %v472 = vadd.f32 %v471, %v470
    %s473 = sld [smem:[#allocation7 + $0x1]]
    %v474 = vstv %s473
    %v475 = vmul.f32 %v474, %v144
    %v476 = vadd.f32 %v472, %v475
    %s477 = sld [smem:[#allocation7 + $0x2]]
    %v478 = vstv %s477
    %v479 = vmul.f32 %v478, %v167
    %v480 = vadd.f32 %v476, %v479
    %s481 = sld [smem:[#allocation7 + $0x3]]
    %v482 = vstv %s481
    %v483 = vmul.f32 %v482, %v190
    %v484 = vadd.f32 %v480, %v483
    %s485 = sld [smem:[#allocation7 + $0x4]]
    %v486 = vstv %s485
    %v487 = vmul.f32 %v486, %v213
    %v488 = vadd.f32 %v484, %v487
    %s489 = sld [smem:[#allocation7 + $0x5]]
    %v490 = vstv %s489
    %v491 = vmul.f32 %v490, %v236
    %v492 = vadd.f32 %v488, %v491
    %s493 = sld [smem:[#allocation7 + $0x6]]
    %v494 = vstv %s493
    %v495 = vmul.f32 %v494, %v259
    %v496 = vadd.f32 %v492, %v495
    %s497 = sld [smem:[#allocation7 + $0x7]]
    %v498 = vstv %s497
    %v499 = vmul.f32 %v498, %v282
    %v500 = vadd.f32 %v496, %v499
    %s501 = sld [smem:[#allocation7 + $0x8]]
    %v502 = vstv %s501
    %v503 = vmul.f32 %v502, %v305
    %v504 = vadd.f32 %v500, %v503
    %s505 = sld [smem:[#allocation7 + $0x9]]
    %v506 = vstv %s505
    %v507 = vmul.f32 %v506, %v328
    %v508 = vadd.f32 %v504, %v507
    %s509 = sld [smem:[#allocation7 + $0xa]]
    %v510 = vstv %s509
    %v511 = vmul.f32 %v510, %v351
    %v512 = vadd.f32 %v508, %v511
    %s513 = sld [smem:[#allocation7 + $0xb]]
    %v514 = vstv %s513
    %v515 = vmul.f32 %v514, %v374
    %v516 = vadd.f32 %v512, %v515
    %s517 = sld [smem:[#allocation7 + $0xc]]
    %v518 = vstv %s517
    %v519 = vmul.f32 %v518, %v397
    %v520 = vadd.f32 %v516, %v519
    %s521 = sld [smem:[#allocation7 + $0xd]]
    %v522 = vstv %s521
    %v523 = vmul.f32 %v522, %v420
    %v524 = vadd.f32 %v520, %v523
    %s525 = sld [smem:[#allocation7 + $0xe]]
    %v526 = vstv %s525
    %v527 = vmul.f32 %v526, %v443
    %v528 = vadd.f32 %v524, %v527
    %s529 = sld [smem:[#allocation7 + $0xf]]
    %v530 = vstv %s529
    %v531 = vmul.f32 %v530, %v466
    %v532 = vadd.f32 %v528, %v531
    %v533 = vmax.f32 %v532, 0.0
    %s534 = sld [smem:[#allocation8 + $0x1]]
    %s535 = sld [smem:[#allocation7 + $0x10]]
    %v536 = vstv %s535
    %v537 = vmul.f32 %v536, %v121
    %v538 = vstv %s534
    %v539 = vadd.f32 %v538, %v537
    %s540 = sld [smem:[#allocation7 + $0x11]]
    %v541 = vstv %s540
    %v542 = vmul.f32 %v541, %v144
    %v543 = vadd.f32 %v539, %v542
    %s544 = sld [smem:[#allocation7 + $0x12]]
    %v545 = vstv %s544
    %v546 = vmul.f32 %v545, %v167
    %v547 = vadd.f32 %v543, %v546
    %s548 = sld [smem:[#allocation7 + $0x13]]
    %v549 = vstv %s548
    %v550 = vmul.f32 %v549, %v190
    %v551 = vadd.f32 %v547, %v550
    %s552 = sld [smem:[#allocation7 + $0x14]]
    %v553 = vstv %s552
    %v554 = vmul.f32 %v553, %v213
    %v555 = vadd.f32 %v551, %v554
    %s556 = sld [smem:[#allocation7 + $0x15]]
    %v557 = vstv %s556
    %v558 = vmul.f32 %v557, %v236
    %v559 = vadd.f32 %v555, %v558
    %s560 = sld [smem:[#allocation7 + $0x16]]
    %v561 = vstv %s560
    %v562 = vmul.f32 %v561, %v259
    %v563 = vadd.f32 %v559, %v562
    %s564 = sld [smem:[#allocation7 + $0x17]]
    %v565 = vstv %s564
    %v566 = vmul.f32 %v565, %v282
    %v567 = vadd.f32 %v563, %v566
    %s568 = sld [smem:[#allocation7 + $0x18]]
    %v569 = vstv %s568
    %v570 = vmul.f32 %v569, %v305
    %v571 = vadd.f32 %v567, %v570
    %s572 = sld [smem:[#allocation7 + $0x19]]
    %v573 = vstv %s572
    %v574 = vmul.f32 %v573, %v328
    %v575 = vadd.f32 %v571, %v574
    %s576 = sld [smem:[#allocation7 + $0x1a]]
    %v577 = vstv %s576
    %v578 = vmul.f32 %v577, %v351
    %v579 = vadd.f32 %v575, %v578
    %s580 = sld [smem:[#allocation7 + $0x1b]]
    %v581 = vstv %s580
    %v582 = vmul.f32 %v581, %v374
    %v583 = vadd.f32 %v579, %v582
    %s584 = sld [smem:[#allocation7 + $0x1c]]
    %v585 = vstv %s584
    %v586 = vmul.f32 %v585, %v397
    %v587 = vadd.f32 %v583, %v586
    %s588 = sld [smem:[#allocation7 + $0x1d]]
    %v589 = vstv %s588
    %v590 = vmul.f32 %v589, %v420
    %v591 = vadd.f32 %v587, %v590
    %s592 = sld [smem:[#allocation7 + $0x1e]]
    %v593 = vstv %s592
    %v594 = vmul.f32 %v593, %v443
    %v595 = vadd.f32 %v591, %v594
    %s596 = sld [smem:[#allocation7 + $0x1f]]
    %v597 = vstv %s596
    %v598 = vmul.f32 %v597, %v466
    %v599 = vadd.f32 %v595, %v598
    %v600 = vmax.f32 %v599, 0.0
    %s601 = sld [smem:[#allocation8 + $0x2]]
    %s602 = sld [smem:[#allocation7 + $0x20]]
    %v603 = vstv %s602
    %v604 = vmul.f32 %v603, %v121
    %v605 = vstv %s601
    %v606 = vadd.f32 %v605, %v604
    %s607 = sld [smem:[#allocation7 + $0x21]]
    %v608 = vstv %s607
    %v609 = vmul.f32 %v608, %v144
    %v610 = vadd.f32 %v606, %v609
    %s611 = sld [smem:[#allocation7 + $0x22]]
    %v612 = vstv %s611
    %v613 = vmul.f32 %v612, %v167
    %v614 = vadd.f32 %v610, %v613
    %s615 = sld [smem:[#allocation7 + $0x23]]
    %v616 = vstv %s615
    %v617 = vmul.f32 %v616, %v190
    %v618 = vadd.f32 %v614, %v617
    %s619 = sld [smem:[#allocation7 + $0x24]]
    %v620 = vstv %s619
    %v621 = vmul.f32 %v620, %v213
    %v622 = vadd.f32 %v618, %v621
    %s623 = sld [smem:[#allocation7 + $0x25]]
    %v624 = vstv %s623
    %v625 = vmul.f32 %v624, %v236
    %v626 = vadd.f32 %v622, %v625
    %s627 = sld [smem:[#allocation7 + $0x26]]
    %v628 = vstv %s627
    %v629 = vmul.f32 %v628, %v259
    %v630 = vadd.f32 %v626, %v629
    %s631 = sld [smem:[#allocation7 + $0x27]]
    %v632 = vstv %s631
    %v633 = vmul.f32 %v632, %v282
    %v634 = vadd.f32 %v630, %v633
    %s635 = sld [smem:[#allocation7 + $0x28]]
    %v636 = vstv %s635
    %v637 = vmul.f32 %v636, %v305
    %v638 = vadd.f32 %v634, %v637
    %s639 = sld [smem:[#allocation7 + $0x29]]
    %v640 = vstv %s639
    %v641 = vmul.f32 %v640, %v328
    %v642 = vadd.f32 %v638, %v641
    %s643 = sld [smem:[#allocation7 + $0x2a]]
    %v644 = vstv %s643
    %v645 = vmul.f32 %v644, %v351
    %v646 = vadd.f32 %v642, %v645
    %s647 = sld [smem:[#allocation7 + $0x2b]]
    %v648 = vstv %s647
    %v649 = vmul.f32 %v648, %v374
    %v650 = vadd.f32 %v646, %v649
    %s651 = sld [smem:[#allocation7 + $0x2c]]
    %v652 = vstv %s651
    %v653 = vmul.f32 %v652, %v397
    %v654 = vadd.f32 %v650, %v653
    %s655 = sld [smem:[#allocation7 + $0x2d]]
    %v656 = vstv %s655
    %v657 = vmul.f32 %v656, %v420
    %v658 = vadd.f32 %v654, %v657
    %s659 = sld [smem:[#allocation7 + $0x2e]]
    %v660 = vstv %s659
    %v661 = vmul.f32 %v660, %v443
    %v662 = vadd.f32 %v658, %v661
    %s663 = sld [smem:[#allocation7 + $0x2f]]
    %v664 = vstv %s663
    %v665 = vmul.f32 %v664, %v466
    %v666 = vadd.f32 %v662, %v665
    %v667 = vmax.f32 %v666, 0.0
    %s668 = sld [smem:[#allocation8 + $0x3]]
    %s669 = sld [smem:[#allocation7 + $0x30]]
    %v670 = vstv %s669
    %v671 = vmul.f32 %v670, %v121
    %v672 = vstv %s668
    %v673 = vadd.f32 %v672, %v671
    %s674 = sld [smem:[#allocation7 + $0x31]]
    %v675 = vstv %s674
    %v676 = vmul.f32 %v675, %v144
    %v677 = vadd.f32 %v673, %v676
    %s678 = sld [smem:[#allocation7 + $0x32]]
    %v679 = vstv %s678
    %v680 = vmul.f32 %v679, %v167
    %v681 = vadd.f32 %v677, %v680
    %s682 = sld [smem:[#allocation7 + $0x33]]
    %v683 = vstv %s682
    %v684 = vmul.f32 %v683, %v190
    %v685 = vadd.f32 %v681, %v684
    %s686 = sld [smem:[#allocation7 + $0x34]]
    %v687 = vstv %s686
    %v688 = vmul.f32 %v687, %v213
    %v689 = vadd.f32 %v685, %v688
    %s690 = sld [smem:[#allocation7 + $0x35]]
    %v691 = vstv %s690
    %v692 = vmul.f32 %v691, %v236
    %v693 = vadd.f32 %v689, %v692
    %s694 = sld [smem:[#allocation7 + $0x36]]
    %v695 = vstv %s694
    %v696 = vmul.f32 %v695, %v259
    %v697 = vadd.f32 %v693, %v696
    %s698 = sld [smem:[#allocation7 + $0x37]]
    %v699 = vstv %s698
    %v700 = vmul.f32 %v699, %v282
    %v701 = vadd.f32 %v697, %v700
    %s702 = sld [smem:[#allocation7 + $0x38]]
    %v703 = vstv %s702
    %v704 = vmul.f32 %v703, %v305
    %v705 = vadd.f32 %v701, %v704
    %s706 = sld [smem:[#allocation7 + $0x39]]
    %v707 = vstv %s706
    %v708 = vmul.f32 %v707, %v328
    %v709 = vadd.f32 %v705, %v708
    %s710 = sld [smem:[#allocation7 + $0x3a]]
    %v711 = vstv %s710
    %v712 = vmul.f32 %v711, %v351
    %v713 = vadd.f32 %v709, %v712
    %s714 = sld [smem:[#allocation7 + $0x3b]]
    %v715 = vstv %s714
    %v716 = vmul.f32 %v715, %v374
    %v717 = vadd.f32 %v713, %v716
    %s718 = sld [smem:[#allocation7 + $0x3c]]
    %v719 = vstv %s718
    %v720 = vmul.f32 %v719, %v397
    %v721 = vadd.f32 %v717, %v720
    %s722 = sld [smem:[#allocation7 + $0x3d]]
    %v723 = vstv %s722
    %v724 = vmul.f32 %v723, %v420
    %v725 = vadd.f32 %v721, %v724
    %s726 = sld [smem:[#allocation7 + $0x3e]]
    %v727 = vstv %s726
    %v728 = vmul.f32 %v727, %v443
    %v729 = vadd.f32 %v725, %v728
    %s730 = sld [smem:[#allocation7 + $0x3f]]
    %v731 = vstv %s730
    %v732 = vmul.f32 %v731, %v466
    %v733 = vadd.f32 %v729, %v732
    %v734 = vmax.f32 %v733, 0.0
    %s735 = sld [smem:[#allocation8 + $0x4]]
    %s736 = sld [smem:[#allocation7 + $0x40]]
    %v737 = vstv %s736
    %v738 = vmul.f32 %v737, %v121
    %v739 = vstv %s735
    %v740 = vadd.f32 %v739, %v738
    %s741 = sld [smem:[#allocation7 + $0x41]]
    %v742 = vstv %s741
    %v743 = vmul.f32 %v742, %v144
    %v744 = vadd.f32 %v740, %v743
    %s745 = sld [smem:[#allocation7 + $0x42]]
    %v746 = vstv %s745
    %v747 = vmul.f32 %v746, %v167
    %v748 = vadd.f32 %v744, %v747
    %s749 = sld [smem:[#allocation7 + $0x43]]
    %v750 = vstv %s749
    %v751 = vmul.f32 %v750, %v190
    %v752 = vadd.f32 %v748, %v751
    %s753 = sld [smem:[#allocation7 + $0x44]]
    %v754 = vstv %s753
    %v755 = vmul.f32 %v754, %v213
    %v756 = vadd.f32 %v752, %v755
    %s757 = sld [smem:[#allocation7 + $0x45]]
    %v758 = vstv %s757
    %v759 = vmul.f32 %v758, %v236
    %v760 = vadd.f32 %v756, %v759
    %s761 = sld [smem:[#allocation7 + $0x46]]
    %v762 = vstv %s761
    %v763 = vmul.f32 %v762, %v259
    %v764 = vadd.f32 %v760, %v763
    %s765 = sld [smem:[#allocation7 + $0x47]]
    %v766 = vstv %s765
    %v767 = vmul.f32 %v766, %v282
    %v768 = vadd.f32 %v764, %v767
    %s769 = sld [smem:[#allocation7 + $0x48]]
    %v770 = vstv %s769
    %v771 = vmul.f32 %v770, %v305
    %v772 = vadd.f32 %v768, %v771
    %s773 = sld [smem:[#allocation7 + $0x49]]
    %v774 = vstv %s773
    %v775 = vmul.f32 %v774, %v328
    %v776 = vadd.f32 %v772, %v775
    %s777 = sld [smem:[#allocation7 + $0x4a]]
    %v778 = vstv %s777
    %v779 = vmul.f32 %v778, %v351
    %v780 = vadd.f32 %v776, %v779
    %s781 = sld [smem:[#allocation7 + $0x4b]]
    %v782 = vstv %s781
    %v783 = vmul.f32 %v782, %v374
    %v784 = vadd.f32 %v780, %v783
    %s785 = sld [smem:[#allocation7 + $0x4c]]
    %v786 = vstv %s785
    %v787 = vmul.f32 %v786, %v397
    %v788 = vadd.f32 %v784, %v787
    %s789 = sld [smem:[#allocation7 + $0x4d]]
    %v790 = vstv %s789
    %v791 = vmul.f32 %v790, %v420
    %v792 = vadd.f32 %v788, %v791
    %s793 = sld [smem:[#allocation7 + $0x4e]]
    %v794 = vstv %s793
    %v795 = vmul.f32 %v794, %v443
    %v796 = vadd.f32 %v792, %v795
    %s797 = sld [smem:[#allocation7 + $0x4f]]
    %v798 = vstv %s797
    %v799 = vmul.f32 %v798, %v466
    %v800 = vadd.f32 %v796, %v799
    %v801 = vmax.f32 %v800, 0.0
    %s802 = sld [smem:[#allocation8 + $0x5]]
    %s803 = sld [smem:[#allocation7 + $0x50]]
    %v804 = vstv %s803
    %v805 = vmul.f32 %v804, %v121
    %v806 = vstv %s802
    %v807 = vadd.f32 %v806, %v805
    %s808 = sld [smem:[#allocation7 + $0x51]]
    %v809 = vstv %s808
    %v810 = vmul.f32 %v809, %v144
    %v811 = vadd.f32 %v807, %v810
    %s812 = sld [smem:[#allocation7 + $0x52]]
    %v813 = vstv %s812
    %v814 = vmul.f32 %v813, %v167
    %v815 = vadd.f32 %v811, %v814
    %s816 = sld [smem:[#allocation7 + $0x53]]
    %v817 = vstv %s816
    %v818 = vmul.f32 %v817, %v190
    %v819 = vadd.f32 %v815, %v818
    %s820 = sld [smem:[#allocation7 + $0x54]]
    %v821 = vstv %s820
    %v822 = vmul.f32 %v821, %v213
    %v823 = vadd.f32 %v819, %v822
    %s824 = sld [smem:[#allocation7 + $0x55]]
    %v825 = vstv %s824
    %v826 = vmul.f32 %v825, %v236
    %v827 = vadd.f32 %v823, %v826
    %s828 = sld [smem:[#allocation7 + $0x56]]
    %v829 = vstv %s828
    %v830 = vmul.f32 %v829, %v259
    %v831 = vadd.f32 %v827, %v830
    %s832 = sld [smem:[#allocation7 + $0x57]]
    %v833 = vstv %s832
    %v834 = vmul.f32 %v833, %v282
    %v835 = vadd.f32 %v831, %v834
    %s836 = sld [smem:[#allocation7 + $0x58]]
    %v837 = vstv %s836
    %v838 = vmul.f32 %v837, %v305
    %v839 = vadd.f32 %v835, %v838
    %s840 = sld [smem:[#allocation7 + $0x59]]
    %v841 = vstv %s840
    %v842 = vmul.f32 %v841, %v328
    %v843 = vadd.f32 %v839, %v842
    %s844 = sld [smem:[#allocation7 + $0x5a]]
    %v845 = vstv %s844
    %v846 = vmul.f32 %v845, %v351
    %v847 = vadd.f32 %v843, %v846
    %s848 = sld [smem:[#allocation7 + $0x5b]]
    %v849 = vstv %s848
    %v850 = vmul.f32 %v849, %v374
    %v851 = vadd.f32 %v847, %v850
    %s852 = sld [smem:[#allocation7 + $0x5c]]
    %v853 = vstv %s852
    %v854 = vmul.f32 %v853, %v397
    %v855 = vadd.f32 %v851, %v854
    %s856 = sld [smem:[#allocation7 + $0x5d]]
    %v857 = vstv %s856
    %v858 = vmul.f32 %v857, %v420
    %v859 = vadd.f32 %v855, %v858
    %s860 = sld [smem:[#allocation7 + $0x5e]]
    %v861 = vstv %s860
    %v862 = vmul.f32 %v861, %v443
    %v863 = vadd.f32 %v859, %v862
    %s864 = sld [smem:[#allocation7 + $0x5f]]
    %v865 = vstv %s864
    %v866 = vmul.f32 %v865, %v466
    %v867 = vadd.f32 %v863, %v866
    %v868 = vmax.f32 %v867, 0.0
    %s869 = sld [smem:[#allocation8 + $0x6]]
    %s870 = sld [smem:[#allocation7 + $0x60]]
    %v871 = vstv %s870
    %v872 = vmul.f32 %v871, %v121
    %v873 = vstv %s869
    %v874 = vadd.f32 %v873, %v872
    %s875 = sld [smem:[#allocation7 + $0x61]]
    %v876 = vstv %s875
    %v877 = vmul.f32 %v876, %v144
    %v878 = vadd.f32 %v874, %v877
    %s879 = sld [smem:[#allocation7 + $0x62]]
    %v880 = vstv %s879
    %v881 = vmul.f32 %v880, %v167
    %v882 = vadd.f32 %v878, %v881
    %s883 = sld [smem:[#allocation7 + $0x63]]
    %v884 = vstv %s883
    %v885 = vmul.f32 %v884, %v190
    %v886 = vadd.f32 %v882, %v885
    %s887 = sld [smem:[#allocation7 + $0x64]]
    %v888 = vstv %s887
    %v889 = vmul.f32 %v888, %v213
    %v890 = vadd.f32 %v886, %v889
    %s891 = sld [smem:[#allocation7 + $0x65]]
    %v892 = vstv %s891
    %v893 = vmul.f32 %v892, %v236
    %v894 = vadd.f32 %v890, %v893
    %s895 = sld [smem:[#allocation7 + $0x66]]
    %v896 = vstv %s895
    %v897 = vmul.f32 %v896, %v259
    %v898 = vadd.f32 %v894, %v897
    %s899 = sld [smem:[#allocation7 + $0x67]]
    %v900 = vstv %s899
    %v901 = vmul.f32 %v900, %v282
    %v902 = vadd.f32 %v898, %v901
    %s903 = sld [smem:[#allocation7 + $0x68]]
    %v904 = vstv %s903
    %v905 = vmul.f32 %v904, %v305
    %v906 = vadd.f32 %v902, %v905
    %s907 = sld [smem:[#allocation7 + $0x69]]
    %v908 = vstv %s907
    %v909 = vmul.f32 %v908, %v328
    %v910 = vadd.f32 %v906, %v909
    %s911 = sld [smem:[#allocation7 + $0x6a]]
    %v912 = vstv %s911
    %v913 = vmul.f32 %v912, %v351
    %v914 = vadd.f32 %v910, %v913
    %s915 = sld [smem:[#allocation7 + $0x6b]]
    %v916 = vstv %s915
    %v917 = vmul.f32 %v916, %v374
    %v918 = vadd.f32 %v914, %v917
    %s919 = sld [smem:[#allocation7 + $0x6c]]
    %v920 = vstv %s919
    %v921 = vmul.f32 %v920, %v397
    %v922 = vadd.f32 %v918, %v921
    %s923 = sld [smem:[#allocation7 + $0x6d]]
    %v924 = vstv %s923
    %v925 = vmul.f32 %v924, %v420
    %v926 = vadd.f32 %v922, %v925
    %s927 = sld [smem:[#allocation7 + $0x6e]]
    %v928 = vstv %s927
    %v929 = vmul.f32 %v928, %v443
    %v930 = vadd.f32 %v926, %v929
    %s931 = sld [smem:[#allocation7 + $0x6f]]
    %v932 = vstv %s931
    %v933 = vmul.f32 %v932, %v466
    %v934 = vadd.f32 %v930, %v933
    %v935 = vmax.f32 %v934, 0.0
    %s936 = sld [smem:[#allocation8 + $0x7]]
    %s937 = sld [smem:[#allocation7 + $0x70]]
    %v938 = vstv %s937
    %v939 = vmul.f32 %v938, %v121
    %v940 = vstv %s936
    %v941 = vadd.f32 %v940, %v939
    %s942 = sld [smem:[#allocation7 + $0x71]]
    %v943 = vstv %s942
    %v944 = vmul.f32 %v943, %v144
    %v945 = vadd.f32 %v941, %v944
    %s946 = sld [smem:[#allocation7 + $0x72]]
    %v947 = vstv %s946
    %v948 = vmul.f32 %v947, %v167
    %v949 = vadd.f32 %v945, %v948
    %s950 = sld [smem:[#allocation7 + $0x73]]
    %v951 = vstv %s950
    %v952 = vmul.f32 %v951, %v190
    %v953 = vadd.f32 %v949, %v952
    %s954 = sld [smem:[#allocation7 + $0x74]]
    %v955 = vstv %s954
    %v956 = vmul.f32 %v955, %v213
    %v957 = vadd.f32 %v953, %v956
    %s958 = sld [smem:[#allocation7 + $0x75]]
    %v959 = vstv %s958
    %v960 = vmul.f32 %v959, %v236
    %v961 = vadd.f32 %v957, %v960
    %s962 = sld [smem:[#allocation7 + $0x76]]
    %v963 = vstv %s962
    %v964 = vmul.f32 %v963, %v259
    %v965 = vadd.f32 %v961, %v964
    %s966 = sld [smem:[#allocation7 + $0x77]]
    %v967 = vstv %s966
    %v968 = vmul.f32 %v967, %v282
    %v969 = vadd.f32 %v965, %v968
    %s970 = sld [smem:[#allocation7 + $0x78]]
    %v971 = vstv %s970
    %v972 = vmul.f32 %v971, %v305
    %v973 = vadd.f32 %v969, %v972
    %s974 = sld [smem:[#allocation7 + $0x79]]
    %v975 = vstv %s974
    %v976 = vmul.f32 %v975, %v328
    %v977 = vadd.f32 %v973, %v976
    %s978 = sld [smem:[#allocation7 + $0x7a]]
    %v979 = vstv %s978
    %v980 = vmul.f32 %v979, %v351
    %v981 = vadd.f32 %v977, %v980
    %s982 = sld [smem:[#allocation7 + $0x7b]]
    %v983 = vstv %s982
    %v984 = vmul.f32 %v983, %v374
    %v985 = vadd.f32 %v981, %v984
    %s986 = sld [smem:[#allocation7 + $0x7c]]
    %v987 = vstv %s986
    %v988 = vmul.f32 %v987, %v397
    %v989 = vadd.f32 %v985, %v988
    %s990 = sld [smem:[#allocation7 + $0x7d]]
    %v991 = vstv %s990
    %v992 = vmul.f32 %v991, %v420
    %v993 = vadd.f32 %v989, %v992
    %s994 = sld [smem:[#allocation7 + $0x7e]]
    %v995 = vstv %s994
    %v996 = vmul.f32 %v995, %v443
    %v997 = vadd.f32 %v993, %v996
    %s998 = sld [smem:[#allocation7 + $0x7f]]
    %v999 = vstv %s998
    %v1000 = vmul.f32 %v999, %v466
    %v1001 = vadd.f32 %v997, %v1000
    %v1002 = vmax.f32 %v1001, 0.0
    %s1003 = sld [smem:[#allocation2]]
    %s1004 = sld [smem:[#allocation10]]
    %v1005 = vstv %s1004
    %v1006 = vmul.f32 %v1005, %v533
    %v1007 = vstv %s1003
    %v1008 = vadd.f32 %v1007, %v1006
    %s1009 = sld [smem:[#allocation10 + $0x1]]
    %v1010 = vstv %s1009
    %v1011 = vmul.f32 %v1010, %v600
    %v1012 = vadd.f32 %v1008, %v1011
    %s1013 = sld [smem:[#allocation10 + $0x2]]
    %v1014 = vstv %s1013
    %v1015 = vmul.f32 %v1014, %v667
    %v1016 = vadd.f32 %v1012, %v1015
    %s1017 = sld [smem:[#allocation10 + $0x3]]
    %v1018 = vstv %s1017
    %v1019 = vmul.f32 %v1018, %v734
    %v1020 = vadd.f32 %v1016, %v1019
    %s1021 = sld [smem:[#allocation10 + $0x4]]
    %v1022 = vstv %s1021
    %v1023 = vmul.f32 %v1022, %v801
    %v1024 = vadd.f32 %v1020, %v1023
    %s1025 = sld [smem:[#allocation10 + $0x5]]
    %v1026 = vstv %s1025
    %v1027 = vmul.f32 %v1026, %v868
    %v1028 = vadd.f32 %v1024, %v1027
    %s1029 = sld [smem:[#allocation10 + $0x6]]
    %v1030 = vstv %s1029
    %v1031 = vmul.f32 %v1030, %v935
    %v1032 = vadd.f32 %v1028, %v1031
    %s1033 = sld [smem:[#allocation10 + $0x7]]
    %v1034 = vstv %s1033
    %v1035 = vmul.f32 %v1034, %v1002
    %v1036 = vadd.f32 %v1032, %v1035
    %v1037 = vxor.u32 %v1036, 2147483648
    %v1038 = vmul.f32 %v1037, 1.442695
    %v1039 = vpow.pop %v1038
    %v1040 = vadd.f32 %v1039, 1.0
    %v1041 = vrcp.pop %v1040
    %v1042 = vmul.f32 1.0, %v1041
    %1043 = vst [vmem:[%s7] sm:$0xff] %v1042
    // Predicated region
    $region50: #{data_validation_nn_t.1} parent=1 // pred_check
      _
    $region51: #{data_validation_nn_t.1} parent=1 // pred_check_branch
      %1045 = sbr.rel (0) target = $region53
    $region52: #{data_validation_nn_t.1} parent=1 // pred_region
      _
    $region53: #{data_validation_nn_t.1} parent=1 // pred_fallthru
      _
    // Predicated region
    $region54: #{data_validation_nn_t.1} parent=1 // pred_check
      _
    $region55: #{data_validation_nn_t.1} parent=1 // pred_check_branch
      %1047 = sbr.rel (0) target = $region57
    $region56: #{data_validation_nn_t.1} parent=1 // pred_region
      _
    $region57: #{data_validation_nn_t.1} parent=1 // pred_fallthru
      _
    %1048 = vsyncpa [#allocation4], 1
    %1049 = vsyncpa [#allocation6], 1
    %1050 = vsyncpa [#allocation9], 1

</llo_original>
